<compile_context>
chip_gen: v7x
topology: tpu7x:2x2x1
jax: 0.10.0
libtpu: 0.0.40
codegen_flags: <defaults>
</compile_context>

<pallas_src>
import jax
import jax.numpy as jnp
from jax import lax
from jax.experimental import pallas as pl
from jax.experimental.pallas import tpu as pltpu

# ---- static problem sizes (from the module) ----
H_IN, W_IN = 8, 8
KH, KW = 3, 3
STRIDE = 2
PAD = 1
OUT_PAD = 1
H_OUT = (H_IN - 1) * STRIDE - 2 * PAD + KH + OUT_PAD   # 16
W_OUT = (W_IN - 1) * STRIDE - 2 * PAD + KW + OUT_PAD   # 16


def _convt_fused_kernel(x_ref, wb_ref, o_ref):
    """ConvTranspose2d(1,1,3,2,1,1) + folded relu/sub/relu/sub/relu epilogue.

    Index relation of the transposed conv (stride 2, pad 1, output_pad 1):
        out[y, x] = sum_{r,c} in[r, c] * w[y - 2r + 1, x - 2c + 1]     (taps in [0, 3))
    which separates per kernel row ky into
        out = sum_ky  R_ky @ in @ C_ky
    with R_ky[y, r] = [y - 2r + 1 == ky]  (16x8, 0/1 row scatter, realizes stride-2 rows
    and output_padding) and C_ky[c, x] = w[ky, x - 2c + 1]  (8x16 column operator).
    Both operators are built in-register from iotas + SMEM scalars, so the kernel emits
    the (16,16) result directly -- no phase slab, no un-interleave, no shifted taps.

    x_ref : (1, 1, 8, 8)   f32 VMEM   input plane (leading unit dims squeezed here)
    wb_ref: (10,)          f32 SMEM   [w00, w01, w02, w10, ..., w22, bias]
    o_ref : (1, 1, 16, 16) f32 VMEM   final activation
    """
    x = x_ref[0, 0]                                                  # (8, 8)

    # dcol[c, xo] = xo - 2c + 1 : which kernel-column tap links in-col c to out-col xo.
    ci = lax.broadcasted_iota(jnp.int32, (W_IN, W_OUT), 0)
    xi = lax.broadcasted_iota(jnp.int32, (W_IN, W_OUT), 1)
    dcol = xi - 2 * ci + 1
    # drow[yo, r] = yo - 2r + 1 : which kernel-row tap links in-row r to out-row yo.
    yi = lax.broadcasted_iota(jnp.int32, (H_OUT, H_IN), 0)
    ri = lax.broadcasted_iota(jnp.int32, (H_OUT, H_IN), 1)
    drow = yi - 2 * ri + 1

    terms = []
    for ky in range(KH):                                             # static unroll (3)
        c_ky = jnp.where(dcol == 0, wb_ref[3 * ky + 0],
               jnp.where(dcol == 1, wb_ref[3 * ky + 1],
               jnp.where(dcol == 2, wb_ref[3 * ky + 2], 0.0)))       # (8, 16)
        r_ky = (drow == ky).astype(jnp.float32)                      # (16, 8) 0/1
        t = jnp.dot(x, c_ky, precision=lax.Precision.HIGHEST,
                    preferred_element_type=jnp.float32)              # (8, 16)
        terms.append(jnp.dot(r_ky, t, precision=lax.Precision.HIGHEST,
                             preferred_element_type=jnp.float32))    # (16, 16)
    conv = terms[0] + terms[1] + terms[2]                            # no zero-filled acc

    # Collapsed epilogue: relu(conv + b) + 0.1 == max(conv + (b + 0.1), 0.1).
    bb = wb_ref[9] + 0.1                                             # scalar-unit add
    o_ref[0, 0] = jnp.maximum(conv + bb, 0.1)


@jax.jit
def model_forward(x, weight, bias):
    """x: (1,1,8,8) f32; weight: (1,1,3,3) f32 (ConvTranspose2d layout); bias: (1,) f32.
    Returns (1,1,16,16) f32."""
    # Pack the 9 weight taps + bias into one flat f32 SMEM operand (one-time param glue).
    wb = jnp.concatenate([weight.reshape(-1), bias.reshape(-1)]).astype(jnp.float32)  # (10,)

    cost = pl.CostEstimate(
        flops=2 * KH * (H_IN * W_IN * W_OUT + H_OUT * H_IN * W_OUT),
        transcendentals=0,
        bytes_accessed=(H_IN * W_IN + 10 + H_OUT * W_OUT) * 4,
    )

    return pl.pallas_call(
        _convt_fused_kernel,
        out_shape=jax.ShapeDtypeStruct((1, 1, H_OUT, W_OUT), jnp.float32),
        in_specs=[
            pl.BlockSpec(memory_space=pltpu.MemorySpace.VMEM),   # x, whole (1,1,8,8) plane
            pl.BlockSpec(memory_space=pltpu.MemorySpace.SMEM),   # packed weight+bias scalars
        ],
        out_specs=pl.BlockSpec(memory_space=pltpu.MemorySpace.VMEM),
        cost_estimate=cost,
    )(x.astype(jnp.float32), wb)


def _reference(x, weight, bias):
    """Pure-JAX reference (lax transposed conv via lhs dilation) for sanity check."""
    w_oihw = jnp.flip(jnp.transpose(weight, (1, 0, 2, 3)), axis=(2, 3))
    conv = lax.conv_general_dilated(
        x, w_oihw,
        window_strides=(1, 1),
        padding=((KH - 1 - PAD, KH - 1 - PAD + OUT_PAD),
                 (KW - 1 - PAD, KW - 1 - PAD + OUT_PAD)),
        lhs_dilation=(STRIDE, STRIDE),
        dimension_numbers=('NCHW', 'OIHW', 'NCHW'),
        precision=lax.Precision.HIGHEST,
    ) + bias.reshape(1, 1, 1, 1)
    v = jnp.maximum(conv, 0.0)
    v = jnp.maximum(v - 0.0, 0.0)
    v = jnp.maximum(v - (-0.1), 0.0)
    return v


if __name__ == "__main__":
    key = jax.random.PRNGKey(0)
    kx, kw, kb = jax.random.split(key, 3)

    # deterministic inputs / parameters (ConvTranspose2d(1,1,3): weight (1,1,3,3), bias (1,))
    x = jax.random.normal(kx, (1, 1, H_IN, W_IN), dtype=jnp.float32)
    fan = 1 * KH * KW
    bound = 1.0 / (fan ** 0.5)
    weight = jax.random.uniform(kw, (1, 1, KH, KW), jnp.float32, -bound, bound)
    bias = jax.random.uniform(kb, (1,), jnp.float32, -bound, bound)

    out = jax.block_until_ready(model_forward(x, weight, bias))
    ref = jax.block_until_ready(_reference(x, weight, bias))

    assert out.shape == (1, 1, H_OUT, W_OUT), out.shape
    # HIGHEST-precision f32 MXU matmuls are ~exact; the 2e-3 budget also covers a
    # lower-precision matmul lowering while still catching any real indexing/tap bug
    # (which would produce O(0.1-1) errors).
    assert jnp.allclose(out, ref, atol=2e-3, rtol=2e-3), float(jnp.max(jnp.abs(out - ref)))
    print("KERNEL_OK")
</pallas_src>

<mosaic_0001>
module attributes {stable_mosaic.version = 11 : i64} {
  func.func @_convt_fused_kernel(%arg0: memref<1x1x8x8xf32, #tpu.memory_space<vmem>>, %arg1: memref<10xf32, #tpu.memory_space<smem>>, %arg2: memref<1x1x16x16xf32, #tpu.memory_space<vmem>>) attributes {dimension_semantics = [], scalar_prefetch = 0 : i64, scratch_operands = 0 : i64, tpu.core_type = #tpu.core_type<tc>} {
    %c0 = arith.constant 0 : index
    %c0_0 = arith.constant 0 : index
    %c0_1 = arith.constant 0 : index
    %c0_2 = arith.constant 0 : index
    %0 = vector.load %arg0[%c0, %c0_0, %c0_1, %c0_2] : memref<1x1x8x8xf32, #tpu.memory_space<vmem>>, vector<1x1x8x8xf32>
    %1 = vector.shape_cast %0 : vector<1x1x8x8xf32> to vector<8x8xf32>
    %2 = tpu.iota {dimensions = array<i32: 0>} : vector<8x16xi32>
    %3 = tpu.iota {dimensions = array<i32: 1>} : vector<8x16xi32>
    %c2_i32 = arith.constant 2 : i32
    %4 = vector.broadcast %c2_i32 : i32 to vector<8x16xi32>
    %5 = arith.muli %4, %2 : vector<8x16xi32>
    %6 = arith.subi %3, %5 : vector<8x16xi32>
    %c1_i32 = arith.constant 1 : i32
    %7 = vector.broadcast %c1_i32 : i32 to vector<8x16xi32>
    %8 = arith.addi %6, %7 : vector<8x16xi32>
    %9 = tpu.iota {dimensions = array<i32: 0>} : vector<16x8xi32>
    %10 = tpu.iota {dimensions = array<i32: 1>} : vector<16x8xi32>
    %c2_i32_3 = arith.constant 2 : i32
    %11 = vector.broadcast %c2_i32_3 : i32 to vector<16x8xi32>
    %12 = arith.muli %11, %10 : vector<16x8xi32>
    %13 = arith.subi %9, %12 : vector<16x8xi32>
    %c1_i32_4 = arith.constant 1 : i32
    %14 = vector.broadcast %c1_i32_4 : i32 to vector<16x8xi32>
    %15 = arith.addi %13, %14 : vector<16x8xi32>
    %c0_i32 = arith.constant 0 : i32
    %16 = vector.broadcast %c0_i32 : i32 to vector<8x16xi32>
    %17 = arith.cmpi eq, %8, %16 : vector<8x16xi32>
    %c0_5 = arith.constant 0 : index
    %18 = memref.load %arg1[%c0_5] : memref<10xf32, #tpu.memory_space<smem>>
    %c1_i32_6 = arith.constant 1 : i32
    %19 = vector.broadcast %c1_i32_6 : i32 to vector<8x16xi32>
    %20 = arith.cmpi eq, %8, %19 : vector<8x16xi32>
    %c1 = arith.constant 1 : index
    %21 = memref.load %arg1[%c1] : memref<10xf32, #tpu.memory_space<smem>>
    %c2_i32_7 = arith.constant 2 : i32
    %22 = vector.broadcast %c2_i32_7 : i32 to vector<8x16xi32>
    %23 = arith.cmpi eq, %8, %22 : vector<8x16xi32>
    %c2 = arith.constant 2 : index
    %24 = memref.load %arg1[%c2] : memref<10xf32, #tpu.memory_space<smem>>
    %cst = arith.constant 0.000000e+00 : f32
    %25 = vector.broadcast %24 : f32 to vector<8x16xf32>
    %26 = vector.broadcast %cst : f32 to vector<8x16xf32>
    %27 = arith.select %23, %25, %26 : vector<8x16xi1>, vector<8x16xf32>
    %28 = vector.broadcast %21 : f32 to vector<8x16xf32>
    %29 = arith.select %20, %28, %27 : vector<8x16xi1>, vector<8x16xf32>
    %30 = vector.broadcast %18 : f32 to vector<8x16xf32>
    %31 = arith.select %17, %30, %29 : vector<8x16xi1>, vector<8x16xf32>
    %c0_i32_8 = arith.constant 0 : i32
    %32 = vector.broadcast %c0_i32_8 : i32 to vector<16x8xi32>
    %33 = arith.cmpi eq, %15, %32 : vector<16x8xi32>
    %34 = arith.extui %33 : vector<16x8xi1> to vector<16x8xi32>
    %35 = arith.sitofp %34 : vector<16x8xi32> to vector<16x8xf32>
    %cst_9 = arith.constant dense<0.000000e+00> : vector<8x16xf32>
    %36 = tpu.matmul %1, %31, %cst_9 {dimension_numbers = #tpu.dot_dimension_numbers<[1], [0], [0], [1], [0, 0, 1, 1], [], []>, precision = #tpu.contract_precision<fp32>} : vector<8x8xf32>, vector<8x16xf32>, vector<8x16xf32> -> vector<8x16xf32>
    %cst_10 = arith.constant dense<0.000000e+00> : vector<16x16xf32>
    %37 = tpu.matmul %35, %36, %cst_10 {dimension_numbers = #tpu.dot_dimension_numbers<[1], [0], [0], [1], [0, 0, 1, 1], [], []>, precision = #tpu.contract_precision<fp32>} : vector<16x8xf32>, vector<8x16xf32>, vector<16x16xf32> -> vector<16x16xf32>
    %c0_i32_11 = arith.constant 0 : i32
    %38 = vector.broadcast %c0_i32_11 : i32 to vector<8x16xi32>
    %39 = arith.cmpi eq, %8, %38 : vector<8x16xi32>
    %c3 = arith.constant 3 : index
    %40 = memref.load %arg1[%c3] : memref<10xf32, #tpu.memory_space<smem>>
    %c1_i32_12 = arith.constant 1 : i32
    %41 = vector.broadcast %c1_i32_12 : i32 to vector<8x16xi32>
    %42 = arith.cmpi eq, %8, %41 : vector<8x16xi32>
    %c4 = arith.constant 4 : index
    %43 = memref.load %arg1[%c4] : memref<10xf32, #tpu.memory_space<smem>>
    %c2_i32_13 = arith.constant 2 : i32
    %44 = vector.broadcast %c2_i32_13 : i32 to vector<8x16xi32>
    %45 = arith.cmpi eq, %8, %44 : vector<8x16xi32>
    %c5 = arith.constant 5 : index
    %46 = memref.load %arg1[%c5] : memref<10xf32, #tpu.memory_space<smem>>
    %cst_14 = arith.constant 0.000000e+00 : f32
    %47 = vector.broadcast %46 : f32 to vector<8x16xf32>
    %48 = vector.broadcast %cst_14 : f32 to vector<8x16xf32>
    %49 = arith.select %45, %47, %48 : vector<8x16xi1>, vector<8x16xf32>
    %50 = vector.broadcast %43 : f32 to vector<8x16xf32>
    %51 = arith.select %42, %50, %49 : vector<8x16xi1>, vector<8x16xf32>
    %52 = vector.broadcast %40 : f32 to vector<8x16xf32>
    %53 = arith.select %39, %52, %51 : vector<8x16xi1>, vector<8x16xf32>
    %c1_i32_15 = arith.constant 1 : i32
    %54 = vector.broadcast %c1_i32_15 : i32 to vector<16x8xi32>
    %55 = arith.cmpi eq, %15, %54 : vector<16x8xi32>
    %56 = arith.extui %55 : vector<16x8xi1> to vector<16x8xi32>
    %57 = arith.sitofp %56 : vector<16x8xi32> to vector<16x8xf32>
    %cst_16 = arith.constant dense<0.000000e+00> : vector<8x16xf32>
    %58 = tpu.matmul %1, %53, %cst_16 {dimension_numbers = #tpu.dot_dimension_numbers<[1], [0], [0], [1], [0, 0, 1, 1], [], []>, precision = #tpu.contract_precision<fp32>} : vector<8x8xf32>, vector<8x16xf32>, vector<8x16xf32> -> vector<8x16xf32>
    %cst_17 = arith.constant dense<0.000000e+00> : vector<16x16xf32>
    %59 = tpu.matmul %57, %58, %cst_17 {dimension_numbers = #tpu.dot_dimension_numbers<[1], [0], [0], [1], [0, 0, 1, 1], [], []>, precision = #tpu.contract_precision<fp32>} : vector<16x8xf32>, vector<8x16xf32>, vector<16x16xf32> -> vector<16x16xf32>
    %c0_i32_18 = arith.constant 0 : i32
    %60 = vector.broadcast %c0_i32_18 : i32 to vector<8x16xi32>
    %61 = arith.cmpi eq, %8, %60 : vector<8x16xi32>
    %c6 = arith.constant 6 : index
    %62 = memref.load %arg1[%c6] : memref<10xf32, #tpu.memory_space<smem>>
    %c1_i32_19 = arith.constant 1 : i32
    %63 = vector.broadcast %c1_i32_19 : i32 to vector<8x16xi32>
    %64 = arith.cmpi eq, %8, %63 : vector<8x16xi32>
    %c7 = arith.constant 7 : index
    %65 = memref.load %arg1[%c7] : memref<10xf32, #tpu.memory_space<smem>>
    %c2_i32_20 = arith.constant 2 : i32
    %66 = vector.broadcast %c2_i32_20 : i32 to vector<8x16xi32>
    %67 = arith.cmpi eq, %8, %66 : vector<8x16xi32>
    %c8 = arith.constant 8 : index
    %68 = memref.load %arg1[%c8] : memref<10xf32, #tpu.memory_space<smem>>
    %cst_21 = arith.constant 0.000000e+00 : f32
    %69 = vector.broadcast %68 : f32 to vector<8x16xf32>
    %70 = vector.broadcast %cst_21 : f32 to vector<8x16xf32>
    %71 = arith.select %67, %69, %70 : vector<8x16xi1>, vector<8x16xf32>
    %72 = vector.broadcast %65 : f32 to vector<8x16xf32>
    %73 = arith.select %64, %72, %71 : vector<8x16xi1>, vector<8x16xf32>
    %74 = vector.broadcast %62 : f32 to vector<8x16xf32>
    %75 = arith.select %61, %74, %73 : vector<8x16xi1>, vector<8x16xf32>
    %c2_i32_22 = arith.constant 2 : i32
    %76 = vector.broadcast %c2_i32_22 : i32 to vector<16x8xi32>
    %77 = arith.cmpi eq, %15, %76 : vector<16x8xi32>
    %78 = arith.extui %77 : vector<16x8xi1> to vector<16x8xi32>
    %79 = arith.sitofp %78 : vector<16x8xi32> to vector<16x8xf32>
    %cst_23 = arith.constant dense<0.000000e+00> : vector<8x16xf32>
    %80 = tpu.matmul %1, %75, %cst_23 {dimension_numbers = #tpu.dot_dimension_numbers<[1], [0], [0], [1], [0, 0, 1, 1], [], []>, precision = #tpu.contract_precision<fp32>} : vector<8x8xf32>, vector<8x16xf32>, vector<8x16xf32> -> vector<8x16xf32>
    %cst_24 = arith.constant dense<0.000000e+00> : vector<16x16xf32>
    %81 = tpu.matmul %79, %80, %cst_24 {dimension_numbers = #tpu.dot_dimension_numbers<[1], [0], [0], [1], [0, 0, 1, 1], [], []>, precision = #tpu.contract_precision<fp32>} : vector<16x8xf32>, vector<8x16xf32>, vector<16x16xf32> -> vector<16x16xf32>
    %82 = arith.addf %37, %59 : vector<16x16xf32>
    %83 = arith.addf %82, %81 : vector<16x16xf32>
    %c9 = arith.constant 9 : index
    %84 = memref.load %arg1[%c9] : memref<10xf32, #tpu.memory_space<smem>>
    %cst_25 = arith.constant 1.000000e-01 : f32
    %85 = arith.addf %84, %cst_25 : f32
    %86 = vector.broadcast %85 : f32 to vector<16x16xf32>
    %87 = arith.addf %83, %86 : vector<16x16xf32>
    %cst_26 = arith.constant 1.000000e-01 : f32
    %88 = vector.broadcast %cst_26 : f32 to vector<16x16xf32>
    %89 = arith.maximumf %87, %88 : vector<16x16xf32>
    %c0_27 = arith.constant 0 : index
    %c0_28 = arith.constant 0 : index
    %c0_29 = arith.constant 0 : index
    %c0_30 = arith.constant 0 : index
    %90 = vector.load %arg2[%c0_27, %c0_28, %c0_29, %c0_30] : memref<1x1x16x16xf32, #tpu.memory_space<vmem>>, vector<1x1x16x16xf32>
    %91 = vector.shape_cast %90 : vector<1x1x16x16xf32> to vector<16x16xf32>
    %92 = vector.shape_cast %89 : vector<16x16xf32> to vector<1x1x16x16xf32>
    tpu.vector_store %arg2[%c0_27, %c0_28, %c0_29, %c0_30], %92 {strides = array<i32>} : memref<1x1x16x16xf32, #tpu.memory_space<vmem>>, vector<1x1x16x16xf32>,
    return
  }
}

</mosaic_0001>

<llo_original>
// kernel: model_forward.1
$region0: #{model_forward.1}
  #allocation0 [shape = 'u32[]', space=smem, size = 0x4, offset = 0x4, fixed_abs, tag = 'smem constant byte address 0x4 - core index']
  #allocation1 [shape = 'u32[144,128]{1,0:T(1,128)}', space=vmem, size = 0x12000, scoped, tag = 'internal scratch']
  %s0 = inlined_call_operand.vmem [shape: f32[1,1,8,8], index: 0, kind: input, shape index: {}]
  %s1 = inlined_call_operand.vmem [shape: f32[10], index: 1, kind: input, shape index: {}]
  %s2 = inlined_call_operand.hbm [shape: f32[1,1,16,16], index: 2, kind: output, shape index: {}]
  %s3 = sld [smem:[#allocation0]]
  $region22: #{model_forward.1} parent=0
    _
  %s5 = ssub.s32 1, %s3
  %s6 = scalar_select 0, %s5, %s3
  $region1: #{model_forward.1} parent=0
    #allocation2 [shape = 'u8[512]{0}', space=smem, size = 0x200, scoped, tag = 'input window, operand 1, single buffered']
    #allocation3 [shape = 's32[1]{0}', space=sflag, size = 0x4, scoped, tag = 'scoped memory for model_forward.1']
    #allocation4 [shape = 's32[1]{0}', space=sflag, size = 0x4, scoped, tag = 'scoped memory for model_forward.1']
    #allocation5 [shape = 'u8[8192]{0}', space=vmem, size = 0x2000, scoped, tag = 'output window, operand 0, single buffered']
    %7 = vsyncpa [#allocation4], 0
    %8 = vsyncpa [#allocation3], 0
    // Predicated region
    $region2: #{model_forward.1} parent=1 // pred_check
      _
    $region3: #{model_forward.1} parent=1 // pred_check_branch
      %10 = sbr.rel (0) target = $region5
    $region4: #{model_forward.1} parent=1 // pred_region
      _
    $region5: #{model_forward.1} parent=1 // pred_fallthru
      _
    // Predicated region
    $region6: #{model_forward.1} parent=1 // pred_check
      _
    $region7: #{model_forward.1} parent=1 // pred_check_branch
      %12 = sbr.rel (0) target = $region9
    $region8: #{model_forward.1} parent=1 // pred_region
      %s14 = ssub.s32 16, 16
      %15 = vsyncadd [#allocation4], %s14
      %s17 = sshll.u32 %s1, 4
      %s18 = int_to_ptr.vmem [resolvable:$true] %s17
      %20 = dma.vmem_to_smem %s18, 16, [#allocation2], [#allocation4]
    $region9: #{model_forward.1} parent=1 // pred_fallthru
      _
    // Predicated region
    $region10: #{model_forward.1} parent=1 // pred_check
      _
    $region11: #{model_forward.1} parent=1 // pred_check_branch
      %22 = sbr.rel (0) target = $region13
    $region12: #{model_forward.1} parent=1 // pred_region
      %23 = dma.done [#allocation4], 16
    $region13: #{model_forward.1} parent=1 // pred_fallthru
      _
    %24 = sfence
    %v25 = vld [vmem:[%s0] sm:$0xff]
    %v26 = vlaneseq
    %v27 = vshrl.u32 %v26, 7
    %v28 = vlaneseq
    %v29 = vand.u32 %v28, 127
    %v30 = vmul.u32 %v27, 2
    %v31 = vsub.s32 %v29, %v30
    %v32 = vadd.s32 %v31, 1
    %v33 = vadd.s32 %v27, 8
    %v34 = vmul.u32 %v29, 2
    %v35 = vsub.s32 %v27, %v34
    %v36 = vsub.s32 %v33, %v34
    %v37 = vadd.s32 %v35, 1
    %v38 = vadd.s32 %v36, 1
    %vm39 = vcmp.eq.s32.totalorder %v32, 0
    %s40 = sld [smem:[#allocation2]]
    %vm41 = vcmp.eq.s32.totalorder %v32, 1
    %s42 = sld [smem:[#allocation2 + $0x1]]
    %vm43 = vcmp.eq.s32.totalorder %v32, 2
    %s44 = sld [smem:[#allocation2 + $0x2]]
    %v45 = vstv %s44
    %v46 = vsel %vm43, %v45, 0.0
    %v47 = vstv %s42
    %v48 = vsel %vm41, %v47, %v46
    %v49 = vstv %s40
    %v50 = vsel %vm39, %v49, %v48
    %vm51 = vcmp.eq.s32.totalorder %v37, 0
    %vm52 = vcmp.eq.s32.totalorder %v38, 0
    %v53 = vsel %vm51, 1, 0
    %v54 = vsel %vm52, 1, 0
    %v55 = vcvt.s32.f32 %v53
    %v56 = vcvt.s32.f32 %v54
    %vm57 = vcmask 64512
    %v59 = vsel %vm57, %v25, 0
    %61 = vmatprep.subr.mxu0 0.0
    %v62 = vand.u32 %v50, 4294901760
    %63 = vmatpush1.msra.mxu0 %v62
    %64 = vmatprep.subr.mxu0 0.0
    %65 = vmatpush1.msra.mxu0 0.0
    %66 = vmatprep.subr.mxu0 0.0
    %67 = vmatpush1.msra.mxu0 0.0
    %68 = vmatprep.subr.mxu0 0.0
    %69 = vmatpush1.msra.mxu0 0.0
    %70 = vmatprep.subr.mxu0 0.0
    %71 = vmatpush1.msra.mxu0 0.0
    %72 = vmatprep.subr.mxu0 0.0
    %73 = vmatpush1.msra.mxu0 0.0
    %74 = vmatprep.subr.mxu0 0.0
    %75 = vmatpush1.msra.mxu0 0.0
    %76 = vmatprep.subr.mxu0 0.0
    %77 = vmatpush1.msra.mxu0 0.0
    %78 = vmatprep.subr.mxu0 0.0
    %79 = vmatpush1.msra.mxu0 0.0
    %80 = vmatprep.subr.mxu0 0.0
    %81 = vmatpush1.msra.mxu0 0.0
    %82 = vmatprep.subr.mxu0 0.0
    %83 = vmatpush1.msra.mxu0 0.0
    %84 = vmatprep.subr.mxu0 0.0
    %85 = vmatpush1.msra.mxu0 0.0
    %86 = vmatprep.subr.mxu0 0.0
    %87 = vmatpush1.msra.mxu0 0.0
    %88 = vmatprep.subr.mxu0 0.0
    %89 = vmatpush1.msra.mxu0 0.0
    %90 = vmatprep.subr.mxu0 0.0
    %91 = vmatpush1.msra.mxu0 0.0
    %92 = vmatprep.subr.mxu0 0.0
    %93 = vmatpush1.msra.mxu0 0.0
    %94 = vmatprep.subr.mxu0 0.0
    %95 = vmatpush1.msra.mxu0 0.0
    %96 = vmatprep.subr.mxu0 0.0
    %97 = vmatpush1.msra.mxu0 0.0
    %98 = vmatprep.subr.mxu0 0.0
    %99 = vmatpush1.msra.mxu0 0.0
    %100 = vmatprep.subr.mxu0 0.0
    %101 = vmatpush1.msra.mxu0 0.0
    %102 = vmatprep.subr.mxu0 0.0
    %103 = vmatpush1.msra.mxu0 0.0
    %104 = vmatprep.subr.mxu0 0.0
    %105 = vmatpush1.msra.mxu0 0.0
    %106 = vmatprep.subr.mxu0 0.0
    %107 = vmatpush1.msra.mxu0 0.0
    %108 = vmatprep.subr.mxu0 0.0
    %109 = vmatpush1.msra.mxu0 0.0
    %110 = vmatprep.subr.mxu0 0.0
    %111 = vmatpush1.msra.mxu0 0.0
    %112 = vmatprep.subr.mxu0 0.0
    %113 = vmatpush1.msra.mxu0 0.0
    %114 = vmatprep.subr.mxu0 0.0
    %115 = vmatpush1.msra.mxu0 0.0
    %116 = vmatprep.subr.mxu0 0.0
    %117 = vmatpush1.msra.mxu0 0.0
    %118 = vmatprep.subr.mxu0 0.0
    %119 = vmatpush1.msra.mxu0 0.0
    %120 = vmatprep.subr.mxu0 0.0
    %121 = vmatpush1.msra.mxu0 0.0
    %122 = vmatprep.subr.mxu0 0.0
    %123 = vmatpush1.msra.mxu0 0.0
    %124 = vmatprep.subr.mxu0 0.0
    %125 = vmatpush1.msra.mxu0 0.0
    %126 = vmatprep.mubr.f32.mxu0 0.0
    %v127 = vand.u32 %v59, 4294901760
    %v128 = vsub.f32 %v59, %v127
    %v129 = vand.u32 %v128, 4294901760
    %v130 = vsub.f32 %v128, %v129
    %v131 = vand.u32 %v130, 4294901760
    %132 = vmatmul.mubr.f32.gmra.mrb[0].mxu0 %v131
    %v133 = vpop.f32.mrb[0].mxu0
    %v134 = vadd.f32 0.0, %v133
    %v135 = vpop.f32.mrb[0].mxu0
    %136 = vdwg.mxu0
    %137 = vmatprep.subr.mxu0 0.0
    %v138 = vand.u32 %v50, 4294901760
    %v139 = vsub.f32 %v50, %v138
    %v140 = vand.u32 %v139, 4294901760
    %v141 = vsub.f32 %v139, %v140
    %v142 = vand.u32 %v141, 4294901760
    %143 = vmatpush1.msra.mxu0 %v142
    %144 = vmatprep.subr.mxu0 0.0
    %145 = vmatpush1.msra.mxu0 0.0
    %146 = vmatprep.subr.mxu0 0.0
    %147 = vmatpush1.msra.mxu0 0.0
    %148 = vmatprep.subr.mxu0 0.0
    %149 = vmatpush1.msra.mxu0 0.0
    %150 = vmatprep.subr.mxu0 0.0
    %151 = vmatpush1.msra.mxu0 0.0
    %152 = vmatprep.subr.mxu0 0.0
    %153 = vmatpush1.msra.mxu0 0.0
    %154 = vmatprep.subr.mxu0 0.0
    %155 = vmatpush1.msra.mxu0 0.0
    %156 = vmatprep.subr.mxu0 0.0
    %157 = vmatpush1.msra.mxu0 0.0
    %158 = vmatprep.subr.mxu0 0.0
    %159 = vmatpush1.msra.mxu0 0.0
    %160 = vmatprep.subr.mxu0 0.0
    %161 = vmatpush1.msra.mxu0 0.0
    %162 = vmatprep.subr.mxu0 0.0
    %163 = vmatpush1.msra.mxu0 0.0
    %164 = vmatprep.subr.mxu0 0.0
    %165 = vmatpush1.msra.mxu0 0.0
    %166 = vmatprep.subr.mxu0 0.0
    %167 = vmatpush1.msra.mxu0 0.0
    %168 = vmatprep.subr.mxu0 0.0
    %169 = vmatpush1.msra.mxu0 0.0
    %170 = vmatprep.subr.mxu0 0.0
    %171 = vmatpush1.msra.mxu0 0.0
    %172 = vmatprep.subr.mxu0 0.0
    %173 = vmatpush1.msra.mxu0 0.0
    %174 = vmatprep.subr.mxu0 0.0
    %175 = vmatpush1.msra.mxu0 0.0
    %176 = vmatprep.subr.mxu0 0.0
    %177 = vmatpush1.msra.mxu0 0.0
    %178 = vmatprep.subr.mxu0 0.0
    %179 = vmatpush1.msra.mxu0 0.0
    %180 = vmatprep.subr.mxu0 0.0
    %181 = vmatpush1.msra.mxu0 0.0
    %182 = vmatprep.subr.mxu0 0.0
    %183 = vmatpush1.msra.mxu0 0.0
    %184 = vmatprep.subr.mxu0 0.0
    %185 = vmatpush1.msra.mxu0 0.0
    %186 = vmatprep.subr.mxu0 0.0
    %187 = vmatpush1.msra.mxu0 0.0
    %188 = vmatprep.subr.mxu0 0.0
    %189 = vmatpush1.msra.mxu0 0.0
    %190 = vmatprep.subr.mxu0 0.0
    %191 = vmatpush1.msra.mxu0 0.0
    %192 = vmatprep.subr.mxu0 0.0
    %193 = vmatpush1.msra.mxu0 0.0
    %194 = vmatprep.subr.mxu0 0.0
    %195 = vmatpush1.msra.mxu0 0.0
    %196 = vmatprep.subr.mxu0 0.0
    %197 = vmatpush1.msra.mxu0 0.0
    %198 = vmatprep.subr.mxu0 0.0
    %199 = vmatpush1.msra.mxu0 0.0
    %200 = vmatprep.subr.mxu0 0.0
    %201 = vmatpush1.msra.mxu0 0.0
    %202 = vmatprep.subr.mxu0 0.0
    %203 = vmatpush1.msra.mxu0 0.0
    %204 = vmatprep.subr.mxu0 0.0
    %205 = vmatpush1.msra.mxu0 0.0
    %206 = vmatprep.mubr.f32.mxu0 0.0
    %v207 = vand.u32 %v59, 4294901760
    %208 = vmatmul.mubr.f32.gmra.mrb[0].mxu0 %v207
    %v209 = vpop.f32.mrb[0].mxu0
    %v210 = vadd.f32 %v134, %v209
    %v211 = vpop.f32.mrb[0].mxu0
    %212 = vdwg.mxu0
    %213 = vmatprep.subr.mxu0 0.0
    %v214 = vand.u32 %v50, 4294901760
    %v215 = vsub.f32 %v50, %v214
    %216 = vmatpush1.msra.mxu0 %v215
    %217 = vmatprep.subr.mxu0 0.0
    %218 = vmatpush1.msra.mxu0 0.0
    %219 = vmatprep.subr.mxu0 0.0
    %220 = vmatpush1.msra.mxu0 0.0
    %221 = vmatprep.subr.mxu0 0.0
    %222 = vmatpush1.msra.mxu0 0.0
    %223 = vmatprep.subr.mxu0 0.0
    %224 = vmatpush1.msra.mxu0 0.0
    %225 = vmatprep.subr.mxu0 0.0
    %226 = vmatpush1.msra.mxu0 0.0
    %227 = vmatprep.subr.mxu0 0.0
    %228 = vmatpush1.msra.mxu0 0.0
    %229 = vmatprep.subr.mxu0 0.0
    %230 = vmatpush1.msra.mxu0 0.0
    %231 = vmatprep.subr.mxu0 0.0
    %232 = vmatpush1.msra.mxu0 0.0
    %233 = vmatprep.subr.mxu0 0.0
    %234 = vmatpush1.msra.mxu0 0.0
    %235 = vmatprep.subr.mxu0 0.0
    %236 = vmatpush1.msra.mxu0 0.0
    %237 = vmatprep.subr.mxu0 0.0
    %238 = vmatpush1.msra.mxu0 0.0
    %239 = vmatprep.subr.mxu0 0.0
    %240 = vmatpush1.msra.mxu0 0.0
    %241 = vmatprep.subr.mxu0 0.0
    %242 = vmatpush1.msra.mxu0 0.0
    %243 = vmatprep.subr.mxu0 0.0
    %244 = vmatpush1.msra.mxu0 0.0
    %245 = vmatprep.subr.mxu0 0.0
    %246 = vmatpush1.msra.mxu0 0.0
    %247 = vmatprep.subr.mxu0 0.0
    %248 = vmatpush1.msra.mxu0 0.0
    %249 = vmatprep.subr.mxu0 0.0
    %250 = vmatpush1.msra.mxu0 0.0
    %251 = vmatprep.subr.mxu0 0.0
    %252 = vmatpush1.msra.mxu0 0.0
    %253 = vmatprep.subr.mxu0 0.0
    %254 = vmatpush1.msra.mxu0 0.0
    %255 = vmatprep.subr.mxu0 0.0
    %256 = vmatpush1.msra.mxu0 0.0
    %257 = vmatprep.subr.mxu0 0.0
    %258 = vmatpush1.msra.mxu0 0.0
    %259 = vmatprep.subr.mxu0 0.0
    %260 = vmatpush1.msra.mxu0 0.0
    %261 = vmatprep.subr.mxu0 0.0
    %262 = vmatpush1.msra.mxu0 0.0
    %263 = vmatprep.subr.mxu0 0.0
    %264 = vmatpush1.msra.mxu0 0.0
    %265 = vmatprep.subr.mxu0 0.0
    %266 = vmatpush1.msra.mxu0 0.0
    %267 = vmatprep.subr.mxu0 0.0
    %268 = vmatpush1.msra.mxu0 0.0
    %269 = vmatprep.subr.mxu0 0.0
    %270 = vmatpush1.msra.mxu0 0.0
    %271 = vmatprep.subr.mxu0 0.0
    %272 = vmatpush1.msra.mxu0 0.0
    %273 = vmatprep.subr.mxu0 0.0
    %274 = vmatpush1.msra.mxu0 0.0
    %275 = vmatprep.subr.mxu0 0.0
    %276 = vmatpush1.msra.mxu0 0.0
    %277 = vmatprep.subr.mxu0 0.0
    %278 = vmatpush1.msra.mxu0 0.0
    %279 = vmatprep.mubr.f32.mxu0 0.0
    %v280 = vand.u32 %v59, 4294901760
    %v281 = vsub.f32 %v59, %v280
    %282 = vmatmul.mubr.f32.gmra.mrb[0].mxu0 %v281
    %v283 = vpop.f32.mrb[0].mxu0
    %v284 = vadd.f32 %v210, %v283
    %v285 = vpop.f32.mrb[0].mxu0
    %286 = vdwg.mxu0
    %287 = vmatprep.subr.mxu0 0.0
    %v288 = vand.u32 %v50, 4294901760
    %289 = vmatpush1.msra.mxu0 %v288
    %290 = vmatprep.subr.mxu0 0.0
    %291 = vmatpush1.msra.mxu0 0.0
    %292 = vmatprep.subr.mxu0 0.0
    %293 = vmatpush1.msra.mxu0 0.0
    %294 = vmatprep.subr.mxu0 0.0
    %295 = vmatpush1.msra.mxu0 0.0
    %296 = vmatprep.subr.mxu0 0.0
    %297 = vmatpush1.msra.mxu0 0.0
    %298 = vmatprep.subr.mxu0 0.0
    %299 = vmatpush1.msra.mxu0 0.0
    %300 = vmatprep.subr.mxu0 0.0
    %301 = vmatpush1.msra.mxu0 0.0
    %302 = vmatprep.subr.mxu0 0.0
    %303 = vmatpush1.msra.mxu0 0.0
    %304 = vmatprep.subr.mxu0 0.0
    %305 = vmatpush1.msra.mxu0 0.0
    %306 = vmatprep.subr.mxu0 0.0
    %307 = vmatpush1.msra.mxu0 0.0
    %308 = vmatprep.subr.mxu0 0.0
    %309 = vmatpush1.msra.mxu0 0.0
    %310 = vmatprep.subr.mxu0 0.0
    %311 = vmatpush1.msra.mxu0 0.0
    %312 = vmatprep.subr.mxu0 0.0
    %313 = vmatpush1.msra.mxu0 0.0
    %314 = vmatprep.subr.mxu0 0.0
    %315 = vmatpush1.msra.mxu0 0.0
    %316 = vmatprep.subr.mxu0 0.0
    %317 = vmatpush1.msra.mxu0 0.0
    %318 = vmatprep.subr.mxu0 0.0
    %319 = vmatpush1.msra.mxu0 0.0
    %320 = vmatprep.subr.mxu0 0.0
    %321 = vmatpush1.msra.mxu0 0.0
    %322 = vmatprep.subr.mxu0 0.0
    %323 = vmatpush1.msra.mxu0 0.0
    %324 = vmatprep.subr.mxu0 0.0
    %325 = vmatpush1.msra.mxu0 0.0
    %326 = vmatprep.subr.mxu0 0.0
    %327 = vmatpush1.msra.mxu0 0.0
    %328 = vmatprep.subr.mxu0 0.0
    %329 = vmatpush1.msra.mxu0 0.0
    %330 = vmatprep.subr.mxu0 0.0
    %331 = vmatpush1.msra.mxu0 0.0
    %332 = vmatprep.subr.mxu0 0.0
    %333 = vmatpush1.msra.mxu0 0.0
    %334 = vmatprep.subr.mxu0 0.0
    %335 = vmatpush1.msra.mxu0 0.0
    %336 = vmatprep.subr.mxu0 0.0
    %337 = vmatpush1.msra.mxu0 0.0
    %338 = vmatprep.subr.mxu0 0.0
    %339 = vmatpush1.msra.mxu0 0.0
    %340 = vmatprep.subr.mxu0 0.0
    %341 = vmatpush1.msra.mxu0 0.0
    %342 = vmatprep.subr.mxu0 0.0
    %343 = vmatpush1.msra.mxu0 0.0
    %344 = vmatprep.subr.mxu0 0.0
    %345 = vmatpush1.msra.mxu0 0.0
    %346 = vmatprep.subr.mxu0 0.0
    %347 = vmatpush1.msra.mxu0 0.0
    %348 = vmatprep.subr.mxu0 0.0
    %349 = vmatpush1.msra.mxu0 0.0
    %350 = vmatprep.subr.mxu0 0.0
    %351 = vmatpush1.msra.mxu0 0.0
    %352 = vmatprep.mubr.f32.mxu0 0.0
    %v353 = vand.u32 %v59, 4294901760
    %v354 = vsub.f32 %v59, %v353
    %v355 = vand.u32 %v354, 4294901760
    %356 = vmatmul.mubr.f32.gmra.mrb[0].mxu0 %v355
    %v357 = vpop.f32.mrb[0].mxu0
    %v358 = vadd.f32 %v284, %v357
    %v359 = vpop.f32.mrb[0].mxu0
    %360 = vdwg.mxu0
    %361 = vmatprep.subr.mxu0 0.0
    %v362 = vand.u32 %v50, 4294901760
    %v363 = vsub.f32 %v50, %v362
    %v364 = vand.u32 %v363, 4294901760
    %365 = vmatpush1.msra.mxu0 %v364
    %366 = vmatprep.subr.mxu0 0.0
    %367 = vmatpush1.msra.mxu0 0.0
    %368 = vmatprep.subr.mxu0 0.0
    %369 = vmatpush1.msra.mxu0 0.0
    %370 = vmatprep.subr.mxu0 0.0
    %371 = vmatpush1.msra.mxu0 0.0
    %372 = vmatprep.subr.mxu0 0.0
    %373 = vmatpush1.msra.mxu0 0.0
    %374 = vmatprep.subr.mxu0 0.0
    %375 = vmatpush1.msra.mxu0 0.0
    %376 = vmatprep.subr.mxu0 0.0
    %377 = vmatpush1.msra.mxu0 0.0
    %378 = vmatprep.subr.mxu0 0.0
    %379 = vmatpush1.msra.mxu0 0.0
    %380 = vmatprep.subr.mxu0 0.0
    %381 = vmatpush1.msra.mxu0 0.0
    %382 = vmatprep.subr.mxu0 0.0
    %383 = vmatpush1.msra.mxu0 0.0
    %384 = vmatprep.subr.mxu0 0.0
    %385 = vmatpush1.msra.mxu0 0.0
    %386 = vmatprep.subr.mxu0 0.0
    %387 = vmatpush1.msra.mxu0 0.0
    %388 = vmatprep.subr.mxu0 0.0
    %389 = vmatpush1.msra.mxu0 0.0
    %390 = vmatprep.subr.mxu0 0.0
    %391 = vmatpush1.msra.mxu0 0.0
    %392 = vmatprep.subr.mxu0 0.0
    %393 = vmatpush1.msra.mxu0 0.0
    %394 = vmatprep.subr.mxu0 0.0
    %395 = vmatpush1.msra.mxu0 0.0
    %396 = vmatprep.subr.mxu0 0.0
    %397 = vmatpush1.msra.mxu0 0.0
    %398 = vmatprep.subr.mxu0 0.0
    %399 = vmatpush1.msra.mxu0 0.0
    %400 = vmatprep.subr.mxu0 0.0
    %401 = vmatpush1.msra.mxu0 0.0
    %402 = vmatprep.subr.mxu0 0.0
    %403 = vmatpush1.msra.mxu0 0.0
    %404 = vmatprep.subr.mxu0 0.0
    %405 = vmatpush1.msra.mxu0 0.0
    %406 = vmatprep.subr.mxu0 0.0
    %407 = vmatpush1.msra.mxu0 0.0
    %408 = vmatprep.subr.mxu0 0.0
    %409 = vmatpush1.msra.mxu0 0.0
    %410 = vmatprep.subr.mxu0 0.0
    %411 = vmatpush1.msra.mxu0 0.0
    %412 = vmatprep.subr.mxu0 0.0
    %413 = vmatpush1.msra.mxu0 0.0
    %414 = vmatprep.subr.mxu0 0.0
    %415 = vmatpush1.msra.mxu0 0.0
    %416 = vmatprep.subr.mxu0 0.0
    %417 = vmatpush1.msra.mxu0 0.0
    %418 = vmatprep.subr.mxu0 0.0
    %419 = vmatpush1.msra.mxu0 0.0
    %420 = vmatprep.subr.mxu0 0.0
    %421 = vmatpush1.msra.mxu0 0.0
    %422 = vmatprep.subr.mxu0 0.0
    %423 = vmatpush1.msra.mxu0 0.0
    %424 = vmatprep.subr.mxu0 0.0
    %425 = vmatpush1.msra.mxu0 0.0
    %426 = vmatprep.subr.mxu0 0.0
    %427 = vmatpush1.msra.mxu0 0.0
    %428 = vmatprep.mubr.f32.mxu0 0.0
    %v429 = vand.u32 %v59, 4294901760
    %430 = vmatmul.mubr.f32.gmra.mrb[0].mxu0 %v429
    %v431 = vpop.f32.mrb[0].mxu0
    %v432 = vadd.f32 %v358, %v431
    %v433 = vpop.f32.mrb[0].mxu0
    %434 = vdwg.mxu0
    %435 = vmatprep.subr.mxu0 0.0
    %v436 = vand.u32 %v50, 4294901760
    %437 = vmatpush1.msra.mxu0 %v436
    %438 = vmatprep.subr.mxu0 0.0
    %439 = vmatpush1.msra.mxu0 0.0
    %440 = vmatprep.subr.mxu0 0.0
    %441 = vmatpush1.msra.mxu0 0.0
    %442 = vmatprep.subr.mxu0 0.0
    %443 = vmatpush1.msra.mxu0 0.0
    %444 = vmatprep.subr.mxu0 0.0
    %445 = vmatpush1.msra.mxu0 0.0
    %446 = vmatprep.subr.mxu0 0.0
    %447 = vmatpush1.msra.mxu0 0.0
    %448 = vmatprep.subr.mxu0 0.0
    %449 = vmatpush1.msra.mxu0 0.0
    %450 = vmatprep.subr.mxu0 0.0
    %451 = vmatpush1.msra.mxu0 0.0
    %452 = vmatprep.subr.mxu0 0.0
    %453 = vmatpush1.msra.mxu0 0.0
    %454 = vmatprep.subr.mxu0 0.0
    %455 = vmatpush1.msra.mxu0 0.0
    %456 = vmatprep.subr.mxu0 0.0
    %457 = vmatpush1.msra.mxu0 0.0
    %458 = vmatprep.subr.mxu0 0.0
    %459 = vmatpush1.msra.mxu0 0.0
    %460 = vmatprep.subr.mxu0 0.0
    %461 = vmatpush1.msra.mxu0 0.0
    %462 = vmatprep.subr.mxu0 0.0
    %463 = vmatpush1.msra.mxu0 0.0
    %464 = vmatprep.subr.mxu0 0.0
    %465 = vmatpush1.msra.mxu0 0.0
    %466 = vmatprep.subr.mxu0 0.0
    %467 = vmatpush1.msra.mxu0 0.0
    %468 = vmatprep.subr.mxu0 0.0
    %469 = vmatpush1.msra.mxu0 0.0
    %470 = vmatprep.subr.mxu0 0.0
    %471 = vmatpush1.msra.mxu0 0.0
    %472 = vmatprep.subr.mxu0 0.0
    %473 = vmatpush1.msra.mxu0 0.0
    %474 = vmatprep.subr.mxu0 0.0
    %475 = vmatpush1.msra.mxu0 0.0
    %476 = vmatprep.subr.mxu0 0.0
    %477 = vmatpush1.msra.mxu0 0.0
    %478 = vmatprep.subr.mxu0 0.0
    %479 = vmatpush1.msra.mxu0 0.0
    %480 = vmatprep.subr.mxu0 0.0
    %481 = vmatpush1.msra.mxu0 0.0
    %482 = vmatprep.subr.mxu0 0.0
    %483 = vmatpush1.msra.mxu0 0.0
    %484 = vmatprep.subr.mxu0 0.0
    %485 = vmatpush1.msra.mxu0 0.0
    %486 = vmatprep.subr.mxu0 0.0
    %487 = vmatpush1.msra.mxu0 0.0
    %488 = vmatprep.subr.mxu0 0.0
    %489 = vmatpush1.msra.mxu0 0.0
    %490 = vmatprep.subr.mxu0 0.0
    %491 = vmatpush1.msra.mxu0 0.0
    %492 = vmatprep.subr.mxu0 0.0
    %493 = vmatpush1.msra.mxu0 0.0
    %494 = vmatprep.subr.mxu0 0.0
    %495 = vmatpush1.msra.mxu0 0.0
    %496 = vmatprep.subr.mxu0 0.0
    %497 = vmatpush1.msra.mxu0 0.0
    %498 = vmatprep.subr.mxu0 0.0
    %499 = vmatpush1.msra.mxu0 0.0
    %500 = vmatprep.mubr.f32.mxu0 0.0
    %v501 = vand.u32 %v59, 4294901760
    %502 = vmatmul.mubr.f32.gmra.mrb[0].mxu0 %v501
    %v503 = vpop.f32.mrb[0].mxu0
    %v504 = vadd.f32 %v432, %v503
    %v505 = vpop.f32.mrb[0].mxu0
    %506 = vdwg.mxu0
    %s507 = sld [smem:[#allocation2 + $0x3]]
    %s508 = sld [smem:[#allocation2 + $0x4]]
    %s509 = sld [smem:[#allocation2 + $0x5]]
    %v510 = vstv %s509
    %v511 = vsel %vm43, %v510, 0.0
    %v512 = vstv %s508
    %v513 = vsel %vm41, %v512, %v511
    %v514 = vstv %s507
    %v515 = vsel %vm39, %v514, %v513
    %vm516 = vcmp.eq.s32.totalorder %v37, 1
    %vm517 = vcmp.eq.s32.totalorder %v38, 1
    %v518 = vsel %vm516, 1, 0
    %v519 = vsel %vm517, 1, 0
    %v520 = vcvt.s32.f32 %v518
    %v521 = vcvt.s32.f32 %v519
    %522 = vmatprep.subr.mxu0 0.0
    %v523 = vand.u32 %v515, 4294901760
    %524 = vmatpush1.msra.mxu0 %v523
    %525 = vmatprep.subr.mxu0 0.0
    %526 = vmatpush1.msra.mxu0 0.0
    %527 = vmatprep.subr.mxu0 0.0
    %528 = vmatpush1.msra.mxu0 0.0
    %529 = vmatprep.subr.mxu0 0.0
    %530 = vmatpush1.msra.mxu0 0.0
    %531 = vmatprep.subr.mxu0 0.0
    %532 = vmatpush1.msra.mxu0 0.0
    %533 = vmatprep.subr.mxu0 0.0
    %534 = vmatpush1.msra.mxu0 0.0
    %535 = vmatprep.subr.mxu0 0.0
    %536 = vmatpush1.msra.mxu0 0.0
    %537 = vmatprep.subr.mxu0 0.0
    %538 = vmatpush1.msra.mxu0 0.0
    %539 = vmatprep.subr.mxu0 0.0
    %540 = vmatpush1.msra.mxu0 0.0
    %541 = vmatprep.subr.mxu0 0.0
    %542 = vmatpush1.msra.mxu0 0.0
    %543 = vmatprep.subr.mxu0 0.0
    %544 = vmatpush1.msra.mxu0 0.0
    %545 = vmatprep.subr.mxu0 0.0
    %546 = vmatpush1.msra.mxu0 0.0
    %547 = vmatprep.subr.mxu0 0.0
    %548 = vmatpush1.msra.mxu0 0.0
    %549 = vmatprep.subr.mxu0 0.0
    %550 = vmatpush1.msra.mxu0 0.0
    %551 = vmatprep.subr.mxu0 0.0
    %552 = vmatpush1.msra.mxu0 0.0
    %553 = vmatprep.subr.mxu0 0.0
    %554 = vmatpush1.msra.mxu0 0.0
    %555 = vmatprep.subr.mxu0 0.0
    %556 = vmatpush1.msra.mxu0 0.0
    %557 = vmatprep.subr.mxu0 0.0
    %558 = vmatpush1.msra.mxu0 0.0
    %559 = vmatprep.subr.mxu0 0.0
    %560 = vmatpush1.msra.mxu0 0.0
    %561 = vmatprep.subr.mxu0 0.0
    %562 = vmatpush1.msra.mxu0 0.0
    %563 = vmatprep.subr.mxu0 0.0
    %564 = vmatpush1.msra.mxu0 0.0
    %565 = vmatprep.subr.mxu0 0.0
    %566 = vmatpush1.msra.mxu0 0.0
    %567 = vmatprep.subr.mxu0 0.0
    %568 = vmatpush1.msra.mxu0 0.0
    %569 = vmatprep.subr.mxu0 0.0
    %570 = vmatpush1.msra.mxu0 0.0
    %571 = vmatprep.subr.mxu0 0.0
    %572 = vmatpush1.msra.mxu0 0.0
    %573 = vmatprep.subr.mxu0 0.0
    %574 = vmatpush1.msra.mxu0 0.0
    %575 = vmatprep.subr.mxu0 0.0
    %576 = vmatpush1.msra.mxu0 0.0
    %577 = vmatprep.subr.mxu0 0.0
    %578 = vmatpush1.msra.mxu0 0.0
    %579 = vmatprep.subr.mxu0 0.0
    %580 = vmatpush1.msra.mxu0 0.0
    %581 = vmatprep.subr.mxu0 0.0
    %582 = vmatpush1.msra.mxu0 0.0
    %583 = vmatprep.subr.mxu0 0.0
    %584 = vmatpush1.msra.mxu0 0.0
    %585 = vmatprep.subr.mxu0 0.0
    %586 = vmatpush1.msra.mxu0 0.0
    %587 = vmatprep.mubr.f32.mxu0 0.0
    %v588 = vand.u32 %v59, 4294901760
    %v589 = vsub.f32 %v59, %v588
    %v590 = vand.u32 %v589, 4294901760
    %v591 = vsub.f32 %v589, %v590
    %v592 = vand.u32 %v591, 4294901760
    %593 = vmatmul.mubr.f32.gmra.mrb[0].mxu0 %v592
    %v594 = vpop.f32.mrb[0].mxu0
    %v595 = vadd.f32 0.0, %v594
    %v596 = vpop.f32.mrb[0].mxu0
    %597 = vdwg.mxu0
    %598 = vmatprep.subr.mxu0 0.0
    %v599 = vand.u32 %v515, 4294901760
    %v600 = vsub.f32 %v515, %v599
    %v601 = vand.u32 %v600, 4294901760
    %v602 = vsub.f32 %v600, %v601
    %v603 = vand.u32 %v602, 4294901760
    %604 = vmatpush1.msra.mxu0 %v603
    %605 = vmatprep.subr.mxu0 0.0
    %606 = vmatpush1.msra.mxu0 0.0
    %607 = vmatprep.subr.mxu0 0.0
    %608 = vmatpush1.msra.mxu0 0.0
    %609 = vmatprep.subr.mxu0 0.0
    %610 = vmatpush1.msra.mxu0 0.0
    %611 = vmatprep.subr.mxu0 0.0
    %612 = vmatpush1.msra.mxu0 0.0
    %613 = vmatprep.subr.mxu0 0.0
    %614 = vmatpush1.msra.mxu0 0.0
    %615 = vmatprep.subr.mxu0 0.0
    %616 = vmatpush1.msra.mxu0 0.0
    %617 = vmatprep.subr.mxu0 0.0
    %618 = vmatpush1.msra.mxu0 0.0
    %619 = vmatprep.subr.mxu0 0.0
    %620 = vmatpush1.msra.mxu0 0.0
    %621 = vmatprep.subr.mxu0 0.0
    %622 = vmatpush1.msra.mxu0 0.0
    %623 = vmatprep.subr.mxu0 0.0
    %624 = vmatpush1.msra.mxu0 0.0
    %625 = vmatprep.subr.mxu0 0.0
    %626 = vmatpush1.msra.mxu0 0.0
    %627 = vmatprep.subr.mxu0 0.0
    %628 = vmatpush1.msra.mxu0 0.0
    %629 = vmatprep.subr.mxu0 0.0
    %630 = vmatpush1.msra.mxu0 0.0
    %631 = vmatprep.subr.mxu0 0.0
    %632 = vmatpush1.msra.mxu0 0.0
    %633 = vmatprep.subr.mxu0 0.0
    %634 = vmatpush1.msra.mxu0 0.0
    %635 = vmatprep.subr.mxu0 0.0
    %636 = vmatpush1.msra.mxu0 0.0
    %637 = vmatprep.subr.mxu0 0.0
    %638 = vmatpush1.msra.mxu0 0.0
    %639 = vmatprep.subr.mxu0 0.0
    %640 = vmatpush1.msra.mxu0 0.0
    %641 = vmatprep.subr.mxu0 0.0
    %642 = vmatpush1.msra.mxu0 0.0
    %643 = vmatprep.subr.mxu0 0.0
    %644 = vmatpush1.msra.mxu0 0.0
    %645 = vmatprep.subr.mxu0 0.0
    %646 = vmatpush1.msra.mxu0 0.0
    %647 = vmatprep.subr.mxu0 0.0
    %648 = vmatpush1.msra.mxu0 0.0
    %649 = vmatprep.subr.mxu0 0.0
    %650 = vmatpush1.msra.mxu0 0.0
    %651 = vmatprep.subr.mxu0 0.0
    %652 = vmatpush1.msra.mxu0 0.0
    %653 = vmatprep.subr.mxu0 0.0
    %654 = vmatpush1.msra.mxu0 0.0
    %655 = vmatprep.subr.mxu0 0.0
    %656 = vmatpush1.msra.mxu0 0.0
    %657 = vmatprep.subr.mxu0 0.0
    %658 = vmatpush1.msra.mxu0 0.0
    %659 = vmatprep.subr.mxu0 0.0
    %660 = vmatpush1.msra.mxu0 0.0
    %661 = vmatprep.subr.mxu0 0.0
    %662 = vmatpush1.msra.mxu0 0.0
    %663 = vmatprep.subr.mxu0 0.0
    %664 = vmatpush1.msra.mxu0 0.0
    %665 = vmatprep.subr.mxu0 0.0
    %666 = vmatpush1.msra.mxu0 0.0
    %667 = vmatprep.mubr.f32.mxu0 0.0
    %v668 = vand.u32 %v59, 4294901760
    %669 = vmatmul.mubr.f32.gmra.mrb[0].mxu0 %v668
    %v670 = vpop.f32.mrb[0].mxu0
    %v671 = vadd.f32 %v595, %v670
    %v672 = vpop.f32.mrb[0].mxu0
    %673 = vdwg.mxu0
    %674 = vmatprep.subr.mxu0 0.0
    %v675 = vand.u32 %v515, 4294901760
    %v676 = vsub.f32 %v515, %v675
    %677 = vmatpush1.msra.mxu0 %v676
    %678 = vmatprep.subr.mxu0 0.0
    %679 = vmatpush1.msra.mxu0 0.0
    %680 = vmatprep.subr.mxu0 0.0
    %681 = vmatpush1.msra.mxu0 0.0
    %682 = vmatprep.subr.mxu0 0.0
    %683 = vmatpush1.msra.mxu0 0.0
    %684 = vmatprep.subr.mxu0 0.0
    %685 = vmatpush1.msra.mxu0 0.0
    %686 = vmatprep.subr.mxu0 0.0
    %687 = vmatpush1.msra.mxu0 0.0
    %688 = vmatprep.subr.mxu0 0.0
    %689 = vmatpush1.msra.mxu0 0.0
    %690 = vmatprep.subr.mxu0 0.0
    %691 = vmatpush1.msra.mxu0 0.0
    %692 = vmatprep.subr.mxu0 0.0
    %693 = vmatpush1.msra.mxu0 0.0
    %694 = vmatprep.subr.mxu0 0.0
    %695 = vmatpush1.msra.mxu0 0.0
    %696 = vmatprep.subr.mxu0 0.0
    %697 = vmatpush1.msra.mxu0 0.0
    %698 = vmatprep.subr.mxu0 0.0
    %699 = vmatpush1.msra.mxu0 0.0
    %700 = vmatprep.subr.mxu0 0.0
    %701 = vmatpush1.msra.mxu0 0.0
    %702 = vmatprep.subr.mxu0 0.0
    %703 = vmatpush1.msra.mxu0 0.0
    %704 = vmatprep.subr.mxu0 0.0
    %705 = vmatpush1.msra.mxu0 0.0
    %706 = vmatprep.subr.mxu0 0.0
    %707 = vmatpush1.msra.mxu0 0.0
    %708 = vmatprep.subr.mxu0 0.0
    %709 = vmatpush1.msra.mxu0 0.0
    %710 = vmatprep.subr.mxu0 0.0
    %711 = vmatpush1.msra.mxu0 0.0
    %712 = vmatprep.subr.mxu0 0.0
    %713 = vmatpush1.msra.mxu0 0.0
    %714 = vmatprep.subr.mxu0 0.0
    %715 = vmatpush1.msra.mxu0 0.0
    %716 = vmatprep.subr.mxu0 0.0
    %717 = vmatpush1.msra.mxu0 0.0
    %718 = vmatprep.subr.mxu0 0.0
    %719 = vmatpush1.msra.mxu0 0.0
    %720 = vmatprep.subr.mxu0 0.0
    %721 = vmatpush1.msra.mxu0 0.0
    %722 = vmatprep.subr.mxu0 0.0
    %723 = vmatpush1.msra.mxu0 0.0
    %724 = vmatprep.subr.mxu0 0.0
    %725 = vmatpush1.msra.mxu0 0.0
    %726 = vmatprep.subr.mxu0 0.0
    %727 = vmatpush1.msra.mxu0 0.0
    %728 = vmatprep.subr.mxu0 0.0
    %729 = vmatpush1.msra.mxu0 0.0
    %730 = vmatprep.subr.mxu0 0.0
    %731 = vmatpush1.msra.mxu0 0.0
    %732 = vmatprep.subr.mxu0 0.0
    %733 = vmatpush1.msra.mxu0 0.0
    %734 = vmatprep.subr.mxu0 0.0
    %735 = vmatpush1.msra.mxu0 0.0
    %736 = vmatprep.subr.mxu0 0.0
    %737 = vmatpush1.msra.mxu0 0.0
    %738 = vmatprep.subr.mxu0 0.0
    %739 = vmatpush1.msra.mxu0 0.0
    %740 = vmatprep.mubr.f32.mxu0 0.0
    %v741 = vand.u32 %v59, 4294901760
    %v742 = vsub.f32 %v59, %v741
    %743 = vmatmul.mubr.f32.gmra.mrb[0].mxu0 %v742
    %v744 = vpop.f32.mrb[0].mxu0
    %v745 = vadd.f32 %v671, %v744
    %v746 = vpop.f32.mrb[0].mxu0
    %747 = vdwg.mxu0
    %748 = vmatprep.subr.mxu0 0.0
    %v749 = vand.u32 %v515, 4294901760
    %750 = vmatpush1.msra.mxu0 %v749
    %751 = vmatprep.subr.mxu0 0.0
    %752 = vmatpush1.msra.mxu0 0.0
    %753 = vmatprep.subr.mxu0 0.0
    %754 = vmatpush1.msra.mxu0 0.0
    %755 = vmatprep.subr.mxu0 0.0
    %756 = vmatpush1.msra.mxu0 0.0
    %757 = vmatprep.subr.mxu0 0.0
    %758 = vmatpush1.msra.mxu0 0.0
    %759 = vmatprep.subr.mxu0 0.0
    %760 = vmatpush1.msra.mxu0 0.0
    %761 = vmatprep.subr.mxu0 0.0
    %762 = vmatpush1.msra.mxu0 0.0
    %763 = vmatprep.subr.mxu0 0.0
    %764 = vmatpush1.msra.mxu0 0.0
    %765 = vmatprep.subr.mxu0 0.0
    %766 = vmatpush1.msra.mxu0 0.0
    %767 = vmatprep.subr.mxu0 0.0
    %768 = vmatpush1.msra.mxu0 0.0
    %769 = vmatprep.subr.mxu0 0.0
    %770 = vmatpush1.msra.mxu0 0.0
    %771 = vmatprep.subr.mxu0 0.0
    %772 = vmatpush1.msra.mxu0 0.0
    %773 = vmatprep.subr.mxu0 0.0
    %774 = vmatpush1.msra.mxu0 0.0
    %775 = vmatprep.subr.mxu0 0.0
    %776 = vmatpush1.msra.mxu0 0.0
    %777 = vmatprep.subr.mxu0 0.0
    %778 = vmatpush1.msra.mxu0 0.0
    %779 = vmatprep.subr.mxu0 0.0
    %780 = vmatpush1.msra.mxu0 0.0
    %781 = vmatprep.subr.mxu0 0.0
    %782 = vmatpush1.msra.mxu0 0.0
    %783 = vmatprep.subr.mxu0 0.0
    %784 = vmatpush1.msra.mxu0 0.0
    %785 = vmatprep.subr.mxu0 0.0
    %786 = vmatpush1.msra.mxu0 0.0
    %787 = vmatprep.subr.mxu0 0.0
    %788 = vmatpush1.msra.mxu0 0.0
    %789 = vmatprep.subr.mxu0 0.0
    %790 = vmatpush1.msra.mxu0 0.0
    %791 = vmatprep.subr.mxu0 0.0
    %792 = vmatpush1.msra.mxu0 0.0
    %793 = vmatprep.subr.mxu0 0.0
    %794 = vmatpush1.msra.mxu0 0.0
    %795 = vmatprep.subr.mxu0 0.0
    %796 = vmatpush1.msra.mxu0 0.0
    %797 = vmatprep.subr.mxu0 0.0
    %798 = vmatpush1.msra.mxu0 0.0
    %799 = vmatprep.subr.mxu0 0.0
    %800 = vmatpush1.msra.mxu0 0.0
    %801 = vmatprep.subr.mxu0 0.0
    %802 = vmatpush1.msra.mxu0 0.0
    %803 = vmatprep.subr.mxu0 0.0
    %804 = vmatpush1.msra.mxu0 0.0
    %805 = vmatprep.subr.mxu0 0.0
    %806 = vmatpush1.msra.mxu0 0.0
    %807 = vmatprep.subr.mxu0 0.0
    %808 = vmatpush1.msra.mxu0 0.0
    %809 = vmatprep.subr.mxu0 0.0
    %810 = vmatpush1.msra.mxu0 0.0
    %811 = vmatprep.subr.mxu0 0.0
    %812 = vmatpush1.msra.mxu0 0.0
    %813 = vmatprep.mubr.f32.mxu0 0.0
    %v814 = vand.u32 %v59, 4294901760
    %v815 = vsub.f32 %v59, %v814
    %v816 = vand.u32 %v815, 4294901760
    %817 = vmatmul.mubr.f32.gmra.mrb[0].mxu0 %v816
    %v818 = vpop.f32.mrb[0].mxu0
    %v819 = vadd.f32 %v745, %v818
    %v820 = vpop.f32.mrb[0].mxu0
    %821 = vdwg.mxu0
    %822 = vmatprep.subr.mxu0 0.0
    %v823 = vand.u32 %v515, 4294901760
    %v824 = vsub.f32 %v515, %v823
    %v825 = vand.u32 %v824, 4294901760
    %826 = vmatpush1.msra.mxu0 %v825
    %827 = vmatprep.subr.mxu0 0.0
    %828 = vmatpush1.msra.mxu0 0.0
    %829 = vmatprep.subr.mxu0 0.0
    %830 = vmatpush1.msra.mxu0 0.0
    %831 = vmatprep.subr.mxu0 0.0
    %832 = vmatpush1.msra.mxu0 0.0
    %833 = vmatprep.subr.mxu0 0.0
    %834 = vmatpush1.msra.mxu0 0.0
    %835 = vmatprep.subr.mxu0 0.0
    %836 = vmatpush1.msra.mxu0 0.0
    %837 = vmatprep.subr.mxu0 0.0
    %838 = vmatpush1.msra.mxu0 0.0
    %839 = vmatprep.subr.mxu0 0.0
    %840 = vmatpush1.msra.mxu0 0.0
    %841 = vmatprep.subr.mxu0 0.0
    %842 = vmatpush1.msra.mxu0 0.0
    %843 = vmatprep.subr.mxu0 0.0
    %844 = vmatpush1.msra.mxu0 0.0
    %845 = vmatprep.subr.mxu0 0.0
    %846 = vmatpush1.msra.mxu0 0.0
    %847 = vmatprep.subr.mxu0 0.0
    %848 = vmatpush1.msra.mxu0 0.0
    %849 = vmatprep.subr.mxu0 0.0
    %850 = vmatpush1.msra.mxu0 0.0
    %851 = vmatprep.subr.mxu0 0.0
    %852 = vmatpush1.msra.mxu0 0.0
    %853 = vmatprep.subr.mxu0 0.0
    %854 = vmatpush1.msra.mxu0 0.0
    %855 = vmatprep.subr.mxu0 0.0
    %856 = vmatpush1.msra.mxu0 0.0
    %857 = vmatprep.subr.mxu0 0.0
    %858 = vmatpush1.msra.mxu0 0.0
    %859 = vmatprep.subr.mxu0 0.0
    %860 = vmatpush1.msra.mxu0 0.0
    %861 = vmatprep.subr.mxu0 0.0
    %862 = vmatpush1.msra.mxu0 0.0
    %863 = vmatprep.subr.mxu0 0.0
    %864 = vmatpush1.msra.mxu0 0.0
    %865 = vmatprep.subr.mxu0 0.0
    %866 = vmatpush1.msra.mxu0 0.0
    %867 = vmatprep.subr.mxu0 0.0
    %868 = vmatpush1.msra.mxu0 0.0
    %869 = vmatprep.subr.mxu0 0.0
    %870 = vmatpush1.msra.mxu0 0.0
    %871 = vmatprep.subr.mxu0 0.0
    %872 = vmatpush1.msra.mxu0 0.0
    %873 = vmatprep.subr.mxu0 0.0
    %874 = vmatpush1.msra.mxu0 0.0
    %875 = vmatprep.subr.mxu0 0.0
    %876 = vmatpush1.msra.mxu0 0.0
    %877 = vmatprep.subr.mxu0 0.0
    %878 = vmatpush1.msra.mxu0 0.0
    %879 = vmatprep.subr.mxu0 0.0
    %880 = vmatpush1.msra.mxu0 0.0
    %881 = vmatprep.subr.mxu0 0.0
    %882 = vmatpush1.msra.mxu0 0.0
    %883 = vmatprep.subr.mxu0 0.0
    %884 = vmatpush1.msra.mxu0 0.0
    %885 = vmatprep.subr.mxu0 0.0
    %886 = vmatpush1.msra.mxu0 0.0
    %887 = vmatprep.subr.mxu0 0.0
    %888 = vmatpush1.msra.mxu0 0.0
    %889 = vmatprep.mubr.f32.mxu0 0.0
    %v890 = vand.u32 %v59, 4294901760
    %891 = vmatmul.mubr.f32.gmra.mrb[0].mxu0 %v890
    %v892 = vpop.f32.mrb[0].mxu0
    %v893 = vadd.f32 %v819, %v892
    %v894 = vpop.f32.mrb[0].mxu0
    %895 = vdwg.mxu0
    %896 = vmatprep.subr.mxu0 0.0
    %v897 = vand.u32 %v515, 4294901760
    %898 = vmatpush1.msra.mxu0 %v897
    %899 = vmatprep.subr.mxu0 0.0
    %900 = vmatpush1.msra.mxu0 0.0
    %901 = vmatprep.subr.mxu0 0.0
    %902 = vmatpush1.msra.mxu0 0.0
    %903 = vmatprep.subr.mxu0 0.0
    %904 = vmatpush1.msra.mxu0 0.0
    %905 = vmatprep.subr.mxu0 0.0
    %906 = vmatpush1.msra.mxu0 0.0
    %907 = vmatprep.subr.mxu0 0.0
    %908 = vmatpush1.msra.mxu0 0.0
    %909 = vmatprep.subr.mxu0 0.0
    %910 = vmatpush1.msra.mxu0 0.0
    %911 = vmatprep.subr.mxu0 0.0
    %912 = vmatpush1.msra.mxu0 0.0
    %913 = vmatprep.subr.mxu0 0.0
    %914 = vmatpush1.msra.mxu0 0.0
    %915 = vmatprep.subr.mxu0 0.0
    %916 = vmatpush1.msra.mxu0 0.0
    %917 = vmatprep.subr.mxu0 0.0
    %918 = vmatpush1.msra.mxu0 0.0
    %919 = vmatprep.subr.mxu0 0.0
    %920 = vmatpush1.msra.mxu0 0.0
    %921 = vmatprep.subr.mxu0 0.0
    %922 = vmatpush1.msra.mxu0 0.0
    %923 = vmatprep.subr.mxu0 0.0
    %924 = vmatpush1.msra.mxu0 0.0
    %925 = vmatprep.subr.mxu0 0.0
    %926 = vmatpush1.msra.mxu0 0.0
    %927 = vmatprep.subr.mxu0 0.0
    %928 = vmatpush1.msra.mxu0 0.0
    %929 = vmatprep.subr.mxu0 0.0
    %930 = vmatpush1.msra.mxu0 0.0
    %931 = vmatprep.subr.mxu0 0.0
    %932 = vmatpush1.msra.mxu0 0.0
    %933 = vmatprep.subr.mxu0 0.0
    %934 = vmatpush1.msra.mxu0 0.0
    %935 = vmatprep.subr.mxu0 0.0
    %936 = vmatpush1.msra.mxu0 0.0
    %937 = vmatprep.subr.mxu0 0.0
    %938 = vmatpush1.msra.mxu0 0.0
    %939 = vmatprep.subr.mxu0 0.0
    %940 = vmatpush1.msra.mxu0 0.0
    %941 = vmatprep.subr.mxu0 0.0
    %942 = vmatpush1.msra.mxu0 0.0
    %943 = vmatprep.subr.mxu0 0.0
    %944 = vmatpush1.msra.mxu0 0.0
    %945 = vmatprep.subr.mxu0 0.0
    %946 = vmatpush1.msra.mxu0 0.0
    %947 = vmatprep.subr.mxu0 0.0
    %948 = vmatpush1.msra.mxu0 0.0
    %949 = vmatprep.subr.mxu0 0.0
    %950 = vmatpush1.msra.mxu0 0.0
    %951 = vmatprep.subr.mxu0 0.0
    %952 = vmatpush1.msra.mxu0 0.0
    %953 = vmatprep.subr.mxu0 0.0
    %954 = vmatpush1.msra.mxu0 0.0
    %955 = vmatprep.subr.mxu0 0.0
    %956 = vmatpush1.msra.mxu0 0.0
    %957 = vmatprep.subr.mxu0 0.0
    %958 = vmatpush1.msra.mxu0 0.0
    %959 = vmatprep.subr.mxu0 0.0
    %960 = vmatpush1.msra.mxu0 0.0
    %961 = vmatprep.mubr.f32.mxu0 0.0
    %v962 = vand.u32 %v59, 4294901760
    %963 = vmatmul.mubr.f32.gmra.mrb[0].mxu0 %v962
    %v964 = vpop.f32.mrb[0].mxu0
    %v965 = vadd.f32 %v893, %v964
    %v966 = vpop.f32.mrb[0].mxu0
    %967 = vdwg.mxu0
    %v969 = vsel %vm57, %v520, 0
    %v972 = vsel %vm57, %v521, 0
    %974 = vmatprep.subr.mxu0 0.0
    %v975 = vand.u32 %v965, 4294901760
    %976 = vmatpush1.msra.mxu0 %v975
    %977 = vmatprep.subr.mxu0 0.0
    %978 = vmatpush1.msra.mxu0 0.0
    %979 = vmatprep.subr.mxu0 0.0
    %980 = vmatpush1.msra.mxu0 0.0
    %981 = vmatprep.subr.mxu0 0.0
    %982 = vmatpush1.msra.mxu0 0.0
    %983 = vmatprep.subr.mxu0 0.0
    %984 = vmatpush1.msra.mxu0 0.0
    %985 = vmatprep.subr.mxu0 0.0
    %986 = vmatpush1.msra.mxu0 0.0
    %987 = vmatprep.subr.mxu0 0.0
    %988 = vmatpush1.msra.mxu0 0.0
    %989 = vmatprep.subr.mxu0 0.0
    %990 = vmatpush1.msra.mxu0 0.0
    %991 = vmatprep.subr.mxu0 0.0
    %992 = vmatpush1.msra.mxu0 0.0
    %993 = vmatprep.subr.mxu0 0.0
    %994 = vmatpush1.msra.mxu0 0.0
    %995 = vmatprep.subr.mxu0 0.0
    %996 = vmatpush1.msra.mxu0 0.0
    %997 = vmatprep.subr.mxu0 0.0
    %998 = vmatpush1.msra.mxu0 0.0
    %999 = vmatprep.subr.mxu0 0.0
    %1000 = vmatpush1.msra.mxu0 0.0
    %1001 = vmatprep.subr.mxu0 0.0
    %1002 = vmatpush1.msra.mxu0 0.0
    %1003 = vmatprep.subr.mxu0 0.0
    %1004 = vmatpush1.msra.mxu0 0.0
    %1005 = vmatprep.subr.mxu0 0.0
    %1006 = vmatpush1.msra.mxu0 0.0
    %1007 = vmatprep.subr.mxu0 0.0
    %1008 = vmatpush1.msra.mxu0 0.0
    %1009 = vmatprep.subr.mxu0 0.0
    %1010 = vmatpush1.msra.mxu0 0.0
    %1011 = vmatprep.subr.mxu0 0.0
    %1012 = vmatpush1.msra.mxu0 0.0
    %1013 = vmatprep.subr.mxu0 0.0
    %1014 = vmatpush1.msra.mxu0 0.0
    %1015 = vmatprep.subr.mxu0 0.0
    %1016 = vmatpush1.msra.mxu0 0.0
    %1017 = vmatprep.subr.mxu0 0.0
    %1018 = vmatpush1.msra.mxu0 0.0
    %1019 = vmatprep.subr.mxu0 0.0
    %1020 = vmatpush1.msra.mxu0 0.0
    %1021 = vmatprep.subr.mxu0 0.0
    %1022 = vmatpush1.msra.mxu0 0.0
    %1023 = vmatprep.subr.mxu0 0.0
    %1024 = vmatpush1.msra.mxu0 0.0
    %1025 = vmatprep.subr.mxu0 0.0
    %1026 = vmatpush1.msra.mxu0 0.0
    %1027 = vmatprep.subr.mxu0 0.0
    %1028 = vmatpush1.msra.mxu0 0.0
    %1029 = vmatprep.subr.mxu0 0.0
    %1030 = vmatpush1.msra.mxu0 0.0
    %1031 = vmatprep.subr.mxu0 0.0
    %1032 = vmatpush1.msra.mxu0 0.0
    %1033 = vmatprep.subr.mxu0 0.0
    %1034 = vmatpush1.msra.mxu0 0.0
    %1035 = vmatprep.subr.mxu0 0.0
    %1036 = vmatpush1.msra.mxu0 0.0
    %1037 = vmatprep.subr.mxu0 0.0
    %1038 = vmatpush1.msra.mxu0 0.0
    %1039 = vmatprep.mubr.f32.mxu0 0.0
    %v1040 = vand.u32 %v969, 4294901760
    %v1041 = vsub.f32 %v969, %v1040
    %v1042 = vand.u32 %v1041, 4294901760
    %v1043 = vsub.f32 %v1041, %v1042
    %v1044 = vand.u32 %v1043, 4294901760
    %1045 = vmatmul.mubr.f32.gmra.mrb[0].mxu0 %v1044
    %v1046 = vpop.f32.mrb[0].mxu0
    %v1047 = vadd.f32 0.0, %v1046
    %v1048 = vpop.f32.mrb[0].mxu0
    %1049 = vmatprep.mubr.f32.mxu0 0.0
    %v1050 = vand.u32 %v972, 4294901760
    %v1051 = vsub.f32 %v972, %v1050
    %v1052 = vand.u32 %v1051, 4294901760
    %v1053 = vsub.f32 %v1051, %v1052
    %v1054 = vand.u32 %v1053, 4294901760
    %1055 = vmatmul.mubr.f32.gmra.mrb[0].mxu0 %v1054
    %v1056 = vpop.f32.mrb[0].mxu0
    %v1057 = vadd.f32 0.0, %v1056
    %v1058 = vpop.f32.mrb[0].mxu0
    %1059 = vdwg.mxu0
    %1060 = vmatprep.subr.mxu0 0.0
    %v1061 = vand.u32 %v965, 4294901760
    %v1062 = vsub.f32 %v965, %v1061
    %v1063 = vand.u32 %v1062, 4294901760
    %v1064 = vsub.f32 %v1062, %v1063
    %v1065 = vand.u32 %v1064, 4294901760
    %1066 = vmatpush1.msra.mxu0 %v1065
    %1067 = vmatprep.subr.mxu0 0.0
    %1068 = vmatpush1.msra.mxu0 0.0
    %1069 = vmatprep.subr.mxu0 0.0
    %1070 = vmatpush1.msra.mxu0 0.0
    %1071 = vmatprep.subr.mxu0 0.0
    %1072 = vmatpush1.msra.mxu0 0.0
    %1073 = vmatprep.subr.mxu0 0.0
    %1074 = vmatpush1.msra.mxu0 0.0
    %1075 = vmatprep.subr.mxu0 0.0
    %1076 = vmatpush1.msra.mxu0 0.0
    %1077 = vmatprep.subr.mxu0 0.0
    %1078 = vmatpush1.msra.mxu0 0.0
    %1079 = vmatprep.subr.mxu0 0.0
    %1080 = vmatpush1.msra.mxu0 0.0
    %1081 = vmatprep.subr.mxu0 0.0
    %1082 = vmatpush1.msra.mxu0 0.0
    %1083 = vmatprep.subr.mxu0 0.0
    %1084 = vmatpush1.msra.mxu0 0.0
    %1085 = vmatprep.subr.mxu0 0.0
    %1086 = vmatpush1.msra.mxu0 0.0
    %1087 = vmatprep.subr.mxu0 0.0
    %1088 = vmatpush1.msra.mxu0 0.0
    %1089 = vmatprep.subr.mxu0 0.0
    %1090 = vmatpush1.msra.mxu0 0.0
    %1091 = vmatprep.subr.mxu0 0.0
    %1092 = vmatpush1.msra.mxu0 0.0
    %1093 = vmatprep.subr.mxu0 0.0
    %1094 = vmatpush1.msra.mxu0 0.0
    %1095 = vmatprep.subr.mxu0 0.0
    %1096 = vmatpush1.msra.mxu0 0.0
    %1097 = vmatprep.subr.mxu0 0.0
    %1098 = vmatpush1.msra.mxu0 0.0
    %1099 = vmatprep.subr.mxu0 0.0
    %1100 = vmatpush1.msra.mxu0 0.0
    %1101 = vmatprep.subr.mxu0 0.0
    %1102 = vmatpush1.msra.mxu0 0.0
    %1103 = vmatprep.subr.mxu0 0.0
    %1104 = vmatpush1.msra.mxu0 0.0
    %1105 = vmatprep.subr.mxu0 0.0
    %1106 = vmatpush1.msra.mxu0 0.0
    %1107 = vmatprep.subr.mxu0 0.0
    %1108 = vmatpush1.msra.mxu0 0.0
    %1109 = vmatprep.subr.mxu0 0.0
    %1110 = vmatpush1.msra.mxu0 0.0
    %1111 = vmatprep.subr.mxu0 0.0
    %1112 = vmatpush1.msra.mxu0 0.0
    %1113 = vmatprep.subr.mxu0 0.0
    %1114 = vmatpush1.msra.mxu0 0.0
    %1115 = vmatprep.subr.mxu0 0.0
    %1116 = vmatpush1.msra.mxu0 0.0
    %1117 = vmatprep.subr.mxu0 0.0
    %1118 = vmatpush1.msra.mxu0 0.0
    %1119 = vmatprep.subr.mxu0 0.0
    %1120 = vmatpush1.msra.mxu0 0.0
    %1121 = vmatprep.subr.mxu0 0.0
    %1122 = vmatpush1.msra.mxu0 0.0
    %1123 = vmatprep.subr.mxu0 0.0
    %1124 = vmatpush1.msra.mxu0 0.0
    %1125 = vmatprep.subr.mxu0 0.0
    %1126 = vmatpush1.msra.mxu0 0.0
    %1127 = vmatprep.subr.mxu0 0.0
    %1128 = vmatpush1.msra.mxu0 0.0
    %1129 = vmatprep.mubr.f32.mxu0 0.0
    %v1130 = vand.u32 %v969, 4294901760
    %1131 = vmatmul.mubr.f32.gmra.mrb[0].mxu0 %v1130
    %v1132 = vpop.f32.mrb[0].mxu0
    %v1133 = vadd.f32 %v1047, %v1132
    %v1134 = vpop.f32.mrb[0].mxu0
    %1135 = vmatprep.mubr.f32.mxu0 0.0
    %v1136 = vand.u32 %v972, 4294901760
    %1137 = vmatmul.mubr.f32.gmra.mrb[0].mxu0 %v1136
    %v1138 = vpop.f32.mrb[0].mxu0
    %v1139 = vadd.f32 %v1057, %v1138
    %v1140 = vpop.f32.mrb[0].mxu0
    %1141 = vdwg.mxu0
    %1142 = vmatprep.subr.mxu0 0.0
    %v1143 = vand.u32 %v965, 4294901760
    %v1144 = vsub.f32 %v965, %v1143
    %1145 = vmatpush1.msra.mxu0 %v1144
    %1146 = vmatprep.subr.mxu0 0.0
    %1147 = vmatpush1.msra.mxu0 0.0
    %1148 = vmatprep.subr.mxu0 0.0
    %1149 = vmatpush1.msra.mxu0 0.0
    %1150 = vmatprep.subr.mxu0 0.0
    %1151 = vmatpush1.msra.mxu0 0.0
    %1152 = vmatprep.subr.mxu0 0.0
    %1153 = vmatpush1.msra.mxu0 0.0
    %1154 = vmatprep.subr.mxu0 0.0
    %1155 = vmatpush1.msra.mxu0 0.0
    %1156 = vmatprep.subr.mxu0 0.0
    %1157 = vmatpush1.msra.mxu0 0.0
    %1158 = vmatprep.subr.mxu0 0.0
    %1159 = vmatpush1.msra.mxu0 0.0
    %1160 = vmatprep.subr.mxu0 0.0
    %1161 = vmatpush1.msra.mxu0 0.0
    %1162 = vmatprep.subr.mxu0 0.0
    %1163 = vmatpush1.msra.mxu0 0.0
    %1164 = vmatprep.subr.mxu0 0.0
    %1165 = vmatpush1.msra.mxu0 0.0
    %1166 = vmatprep.subr.mxu0 0.0
    %1167 = vmatpush1.msra.mxu0 0.0
    %1168 = vmatprep.subr.mxu0 0.0
    %1169 = vmatpush1.msra.mxu0 0.0
    %1170 = vmatprep.subr.mxu0 0.0
    %1171 = vmatpush1.msra.mxu0 0.0
    %1172 = vmatprep.subr.mxu0 0.0
    %1173 = vmatpush1.msra.mxu0 0.0
    %1174 = vmatprep.subr.mxu0 0.0
    %1175 = vmatpush1.msra.mxu0 0.0
    %1176 = vmatprep.subr.mxu0 0.0
    %1177 = vmatpush1.msra.mxu0 0.0
    %1178 = vmatprep.subr.mxu0 0.0
    %1179 = vmatpush1.msra.mxu0 0.0
    %1180 = vmatprep.subr.mxu0 0.0
    %1181 = vmatpush1.msra.mxu0 0.0
    %1182 = vmatprep.subr.mxu0 0.0
    %1183 = vmatpush1.msra.mxu0 0.0
    %1184 = vmatprep.subr.mxu0 0.0
    %1185 = vmatpush1.msra.mxu0 0.0
    %1186 = vmatprep.subr.mxu0 0.0
    %1187 = vmatpush1.msra.mxu0 0.0
    %1188 = vmatprep.subr.mxu0 0.0
    %1189 = vmatpush1.msra.mxu0 0.0
    %1190 = vmatprep.subr.mxu0 0.0
    %1191 = vmatpush1.msra.mxu0 0.0
    %1192 = vmatprep.subr.mxu0 0.0
    %1193 = vmatpush1.msra.mxu0 0.0
    %1194 = vmatprep.subr.mxu0 0.0
    %1195 = vmatpush1.msra.mxu0 0.0
    %1196 = vmatprep.subr.mxu0 0.0
    %1197 = vmatpush1.msra.mxu0 0.0
    %1198 = vmatprep.subr.mxu0 0.0
    %1199 = vmatpush1.msra.mxu0 0.0
    %1200 = vmatprep.subr.mxu0 0.0
    %1201 = vmatpush1.msra.mxu0 0.0
    %1202 = vmatprep.subr.mxu0 0.0
    %1203 = vmatpush1.msra.mxu0 0.0
    %1204 = vmatprep.subr.mxu0 0.0
    %1205 = vmatpush1.msra.mxu0 0.0
    %1206 = vmatprep.subr.mxu0 0.0
    %1207 = vmatpush1.msra.mxu0 0.0
    %1208 = vmatprep.mubr.f32.mxu0 0.0
    %v1209 = vand.u32 %v969, 4294901760
    %v1210 = vsub.f32 %v969, %v1209
    %1211 = vmatmul.mubr.f32.gmra.mrb[0].mxu0 %v1210
    %v1212 = vpop.f32.mrb[0].mxu0
    %v1213 = vadd.f32 %v1133, %v1212
    %v1214 = vpop.f32.mrb[0].mxu0
    %1215 = vmatprep.mubr.f32.mxu0 0.0
    %v1216 = vand.u32 %v972, 4294901760
    %v1217 = vsub.f32 %v972, %v1216
    %1218 = vmatmul.mubr.f32.gmra.mrb[0].mxu0 %v1217
    %v1219 = vpop.f32.mrb[0].mxu0
    %v1220 = vadd.f32 %v1139, %v1219
    %v1221 = vpop.f32.mrb[0].mxu0
    %1222 = vdwg.mxu0
    %1223 = vmatprep.subr.mxu0 0.0
    %v1224 = vand.u32 %v965, 4294901760
    %1225 = vmatpush1.msra.mxu0 %v1224
    %1226 = vmatprep.subr.mxu0 0.0
    %1227 = vmatpush1.msra.mxu0 0.0
    %1228 = vmatprep.subr.mxu0 0.0
    %1229 = vmatpush1.msra.mxu0 0.0
    %1230 = vmatprep.subr.mxu0 0.0
    %1231 = vmatpush1.msra.mxu0 0.0
    %1232 = vmatprep.subr.mxu0 0.0
    %1233 = vmatpush1.msra.mxu0 0.0
    %1234 = vmatprep.subr.mxu0 0.0
    %1235 = vmatpush1.msra.mxu0 0.0
    %1236 = vmatprep.subr.mxu0 0.0
    %1237 = vmatpush1.msra.mxu0 0.0
    %1238 = vmatprep.subr.mxu0 0.0
    %1239 = vmatpush1.msra.mxu0 0.0
    %1240 = vmatprep.subr.mxu0 0.0
    %1241 = vmatpush1.msra.mxu0 0.0
    %1242 = vmatprep.subr.mxu0 0.0
    %1243 = vmatpush1.msra.mxu0 0.0
    %1244 = vmatprep.subr.mxu0 0.0
    %1245 = vmatpush1.msra.mxu0 0.0
    %1246 = vmatprep.subr.mxu0 0.0
    %1247 = vmatpush1.msra.mxu0 0.0
    %1248 = vmatprep.subr.mxu0 0.0
    %1249 = vmatpush1.msra.mxu0 0.0
    %1250 = vmatprep.subr.mxu0 0.0
    %1251 = vmatpush1.msra.mxu0 0.0
    %1252 = vmatprep.subr.mxu0 0.0
    %1253 = vmatpush1.msra.mxu0 0.0
    %1254 = vmatprep.subr.mxu0 0.0
    %1255 = vmatpush1.msra.mxu0 0.0
    %1256 = vmatprep.subr.mxu0 0.0
    %1257 = vmatpush1.msra.mxu0 0.0
    %1258 = vmatprep.subr.mxu0 0.0
    %1259 = vmatpush1.msra.mxu0 0.0
    %1260 = vmatprep.subr.mxu0 0.0
    %1261 = vmatpush1.msra.mxu0 0.0
    %1262 = vmatprep.subr.mxu0 0.0
    %1263 = vmatpush1.msra.mxu0 0.0
    %1264 = vmatprep.subr.mxu0 0.0
    %1265 = vmatpush1.msra.mxu0 0.0
    %1266 = vmatprep.subr.mxu0 0.0
    %1267 = vmatpush1.msra.mxu0 0.0
    %1268 = vmatprep.subr.mxu0 0.0
    %1269 = vmatpush1.msra.mxu0 0.0
    %1270 = vmatprep.subr.mxu0 0.0
    %1271 = vmatpush1.msra.mxu0 0.0
    %1272 = vmatprep.subr.mxu0 0.0
    %1273 = vmatpush1.msra.mxu0 0.0
    %1274 = vmatprep.subr.mxu0 0.0
    %1275 = vmatpush1.msra.mxu0 0.0
    %1276 = vmatprep.subr.mxu0 0.0
    %1277 = vmatpush1.msra.mxu0 0.0
    %1278 = vmatprep.subr.mxu0 0.0
    %1279 = vmatpush1.msra.mxu0 0.0
    %1280 = vmatprep.subr.mxu0 0.0
    %1281 = vmatpush1.msra.mxu0 0.0
    %1282 = vmatprep.subr.mxu0 0.0
    %1283 = vmatpush1.msra.mxu0 0.0
    %1284 = vmatprep.subr.mxu0 0.0
    %1285 = vmatpush1.msra.mxu0 0.0
    %1286 = vmatprep.subr.mxu0 0.0
    %1287 = vmatpush1.msra.mxu0 0.0
    %1288 = vmatprep.mubr.f32.mxu0 0.0
    %v1289 = vand.u32 %v969, 4294901760
    %v1290 = vsub.f32 %v969, %v1289
    %v1291 = vand.u32 %v1290, 4294901760
    %1292 = vmatmul.mubr.f32.gmra.mrb[0].mxu0 %v1291
    %v1293 = vpop.f32.mrb[0].mxu0
    %v1294 = vadd.f32 %v1213, %v1293
    %v1295 = vpop.f32.mrb[0].mxu0
    %1296 = vmatprep.mubr.f32.mxu0 0.0
    %v1297 = vand.u32 %v972, 4294901760
    %v1298 = vsub.f32 %v972, %v1297
    %v1299 = vand.u32 %v1298, 4294901760
    %1300 = vmatmul.mubr.f32.gmra.mrb[0].mxu0 %v1299
    %v1301 = vpop.f32.mrb[0].mxu0
    %v1302 = vadd.f32 %v1220, %v1301
    %v1303 = vpop.f32.mrb[0].mxu0
    %1304 = vdwg.mxu0
    %1305 = vmatprep.subr.mxu0 0.0
    %v1306 = vand.u32 %v965, 4294901760
    %v1307 = vsub.f32 %v965, %v1306
    %v1308 = vand.u32 %v1307, 4294901760
    %1309 = vmatpush1.msra.mxu0 %v1308
    %1310 = vmatprep.subr.mxu0 0.0
    %1311 = vmatpush1.msra.mxu0 0.0
    %1312 = vmatprep.subr.mxu0 0.0
    %1313 = vmatpush1.msra.mxu0 0.0
    %1314 = vmatprep.subr.mxu0 0.0
    %1315 = vmatpush1.msra.mxu0 0.0
    %1316 = vmatprep.subr.mxu0 0.0
    %1317 = vmatpush1.msra.mxu0 0.0
    %1318 = vmatprep.subr.mxu0 0.0
    %1319 = vmatpush1.msra.mxu0 0.0
    %1320 = vmatprep.subr.mxu0 0.0
    %1321 = vmatpush1.msra.mxu0 0.0
    %1322 = vmatprep.subr.mxu0 0.0
    %1323 = vmatpush1.msra.mxu0 0.0
    %1324 = vmatprep.subr.mxu0 0.0
    %1325 = vmatpush1.msra.mxu0 0.0
    %1326 = vmatprep.subr.mxu0 0.0
    %1327 = vmatpush1.msra.mxu0 0.0
    %1328 = vmatprep.subr.mxu0 0.0
    %1329 = vmatpush1.msra.mxu0 0.0
    %1330 = vmatprep.subr.mxu0 0.0
    %1331 = vmatpush1.msra.mxu0 0.0
    %1332 = vmatprep.subr.mxu0 0.0
    %1333 = vmatpush1.msra.mxu0 0.0
    %1334 = vmatprep.subr.mxu0 0.0
    %1335 = vmatpush1.msra.mxu0 0.0
    %1336 = vmatprep.subr.mxu0 0.0
    %1337 = vmatpush1.msra.mxu0 0.0
    %1338 = vmatprep.subr.mxu0 0.0
    %1339 = vmatpush1.msra.mxu0 0.0
    %1340 = vmatprep.subr.mxu0 0.0
    %1341 = vmatpush1.msra.mxu0 0.0
    %1342 = vmatprep.subr.mxu0 0.0
    %1343 = vmatpush1.msra.mxu0 0.0
    %1344 = vmatprep.subr.mxu0 0.0
    %1345 = vmatpush1.msra.mxu0 0.0
    %1346 = vmatprep.subr.mxu0 0.0
    %1347 = vmatpush1.msra.mxu0 0.0
    %1348 = vmatprep.subr.mxu0 0.0
    %1349 = vmatpush1.msra.mxu0 0.0
    %1350 = vmatprep.subr.mxu0 0.0
    %1351 = vmatpush1.msra.mxu0 0.0
    %1352 = vmatprep.subr.mxu0 0.0
    %1353 = vmatpush1.msra.mxu0 0.0
    %1354 = vmatprep.subr.mxu0 0.0
    %1355 = vmatpush1.msra.mxu0 0.0
    %1356 = vmatprep.subr.mxu0 0.0
    %1357 = vmatpush1.msra.mxu0 0.0
    %1358 = vmatprep.subr.mxu0 0.0
    %1359 = vmatpush1.msra.mxu0 0.0
    %1360 = vmatprep.subr.mxu0 0.0
    %1361 = vmatpush1.msra.mxu0 0.0
    %1362 = vmatprep.subr.mxu0 0.0
    %1363 = vmatpush1.msra.mxu0 0.0
    %1364 = vmatprep.subr.mxu0 0.0
    %1365 = vmatpush1.msra.mxu0 0.0
    %1366 = vmatprep.subr.mxu0 0.0
    %1367 = vmatpush1.msra.mxu0 0.0
    %1368 = vmatprep.subr.mxu0 0.0
    %1369 = vmatpush1.msra.mxu0 0.0
    %1370 = vmatprep.subr.mxu0 0.0
    %1371 = vmatpush1.msra.mxu0 0.0
    %1372 = vmatprep.mubr.f32.mxu0 0.0
    %v1373 = vand.u32 %v969, 4294901760
    %1374 = vmatmul.mubr.f32.gmra.mrb[0].mxu0 %v1373
    %v1375 = vpop.f32.mrb[0].mxu0
    %v1376 = vadd.f32 %v1294, %v1375
    %v1377 = vpop.f32.mrb[0].mxu0
    %1378 = vmatprep.mubr.f32.mxu0 0.0
    %v1379 = vand.u32 %v972, 4294901760
    %1380 = vmatmul.mubr.f32.gmra.mrb[0].mxu0 %v1379
    %v1381 = vpop.f32.mrb[0].mxu0
    %v1382 = vadd.f32 %v1302, %v1381
    %v1383 = vpop.f32.mrb[0].mxu0
    %1384 = vdwg.mxu0
    %1385 = vmatprep.subr.mxu0 0.0
    %v1386 = vand.u32 %v965, 4294901760
    %1387 = vmatpush1.msra.mxu0 %v1386
    %1388 = vmatprep.subr.mxu0 0.0
    %1389 = vmatpush1.msra.mxu0 0.0
    %1390 = vmatprep.subr.mxu0 0.0
    %1391 = vmatpush1.msra.mxu0 0.0
    %1392 = vmatprep.subr.mxu0 0.0
    %1393 = vmatpush1.msra.mxu0 0.0
    %1394 = vmatprep.subr.mxu0 0.0
    %1395 = vmatpush1.msra.mxu0 0.0
    %1396 = vmatprep.subr.mxu0 0.0
    %1397 = vmatpush1.msra.mxu0 0.0
    %1398 = vmatprep.subr.mxu0 0.0
    %1399 = vmatpush1.msra.mxu0 0.0
    %1400 = vmatprep.subr.mxu0 0.0
    %1401 = vmatpush1.msra.mxu0 0.0
    %1402 = vmatprep.subr.mxu0 0.0
    %1403 = vmatpush1.msra.mxu0 0.0
    %1404 = vmatprep.subr.mxu0 0.0
    %1405 = vmatpush1.msra.mxu0 0.0
    %1406 = vmatprep.subr.mxu0 0.0
    %1407 = vmatpush1.msra.mxu0 0.0
    %1408 = vmatprep.subr.mxu0 0.0
    %1409 = vmatpush1.msra.mxu0 0.0
    %1410 = vmatprep.subr.mxu0 0.0
    %1411 = vmatpush1.msra.mxu0 0.0
    %1412 = vmatprep.subr.mxu0 0.0
    %1413 = vmatpush1.msra.mxu0 0.0
    %1414 = vmatprep.subr.mxu0 0.0
    %1415 = vmatpush1.msra.mxu0 0.0
    %1416 = vmatprep.subr.mxu0 0.0
    %1417 = vmatpush1.msra.mxu0 0.0
    %1418 = vmatprep.subr.mxu0 0.0
    %1419 = vmatpush1.msra.mxu0 0.0
    %1420 = vmatprep.subr.mxu0 0.0
    %1421 = vmatpush1.msra.mxu0 0.0
    %1422 = vmatprep.subr.mxu0 0.0
    %1423 = vmatpush1.msra.mxu0 0.0
    %1424 = vmatprep.subr.mxu0 0.0
    %1425 = vmatpush1.msra.mxu0 0.0
    %1426 = vmatprep.subr.mxu0 0.0
    %1427 = vmatpush1.msra.mxu0 0.0
    %1428 = vmatprep.subr.mxu0 0.0
    %1429 = vmatpush1.msra.mxu0 0.0
    %1430 = vmatprep.subr.mxu0 0.0
    %1431 = vmatpush1.msra.mxu0 0.0
    %1432 = vmatprep.subr.mxu0 0.0
    %1433 = vmatpush1.msra.mxu0 0.0
    %1434 = vmatprep.subr.mxu0 0.0
    %1435 = vmatpush1.msra.mxu0 0.0
    %1436 = vmatprep.subr.mxu0 0.0
    %1437 = vmatpush1.msra.mxu0 0.0
    %1438 = vmatprep.subr.mxu0 0.0
    %1439 = vmatpush1.msra.mxu0 0.0
    %1440 = vmatprep.subr.mxu0 0.0
    %1441 = vmatpush1.msra.mxu0 0.0
    %1442 = vmatprep.subr.mxu0 0.0
    %1443 = vmatpush1.msra.mxu0 0.0
    %1444 = vmatprep.subr.mxu0 0.0
    %1445 = vmatpush1.msra.mxu0 0.0
    %1446 = vmatprep.subr.mxu0 0.0
    %1447 = vmatpush1.msra.mxu0 0.0
    %1448 = vmatprep.subr.mxu0 0.0
    %1449 = vmatpush1.msra.mxu0 0.0
    %1450 = vmatprep.mubr.f32.mxu0 0.0
    %v1451 = vand.u32 %v969, 4294901760
    %1452 = vmatmul.mubr.f32.gmra.mrb[0].mxu0 %v1451
    %v1453 = vpop.f32.mrb[0].mxu0
    %v1454 = vadd.f32 %v1376, %v1453
    %v1455 = vpop.f32.mrb[0].mxu0
    %1456 = vmatprep.mubr.f32.mxu0 0.0
    %v1457 = vand.u32 %v972, 4294901760
    %1458 = vmatmul.mubr.f32.gmra.mrb[0].mxu0 %v1457
    %v1459 = vpop.f32.mrb[0].mxu0
    %v1460 = vadd.f32 %v1382, %v1459
    %v1461 = vpop.f32.mrb[0].mxu0
    %1462 = vdwg.mxu0
    %s1463 = sld [smem:[#allocation2 + $0x6]]
    %s1464 = sld [smem:[#allocation2 + $0x7]]
    %s1465 = sld [smem:[#allocation2 + $0x8]]
    %v1466 = vstv %s1465
    %v1467 = vsel %vm43, %v1466, 0.0
    %v1468 = vstv %s1464
    %v1469 = vsel %vm41, %v1468, %v1467
    %v1470 = vstv %s1463
    %v1471 = vsel %vm39, %v1470, %v1469
    %vm1472 = vcmp.eq.s32.totalorder %v37, 2
    %vm1473 = vcmp.eq.s32.totalorder %v38, 2
    %v1474 = vsel %vm1472, 1, 0
    %v1475 = vsel %vm1473, 1, 0
    %v1476 = vcvt.s32.f32 %v1474
    %v1477 = vcvt.s32.f32 %v1475
    %1478 = vmatprep.subr.mxu0 0.0
    %v1479 = vand.u32 %v1471, 4294901760
    %1480 = vmatpush1.msra.mxu0 %v1479
    %1481 = vmatprep.subr.mxu0 0.0
    %1482 = vmatpush1.msra.mxu0 0.0
    %1483 = vmatprep.subr.mxu0 0.0
    %1484 = vmatpush1.msra.mxu0 0.0
    %1485 = vmatprep.subr.mxu0 0.0
    %1486 = vmatpush1.msra.mxu0 0.0
    %1487 = vmatprep.subr.mxu0 0.0
    %1488 = vmatpush1.msra.mxu0 0.0
    %1489 = vmatprep.subr.mxu0 0.0
    %1490 = vmatpush1.msra.mxu0 0.0
    %1491 = vmatprep.subr.mxu0 0.0
    %1492 = vmatpush1.msra.mxu0 0.0
    %1493 = vmatprep.subr.mxu0 0.0
    %1494 = vmatpush1.msra.mxu0 0.0
    %1495 = vmatprep.subr.mxu0 0.0
    %1496 = vmatpush1.msra.mxu0 0.0
    %1497 = vmatprep.subr.mxu0 0.0
    %1498 = vmatpush1.msra.mxu0 0.0
    %1499 = vmatprep.subr.mxu0 0.0
    %1500 = vmatpush1.msra.mxu0 0.0
    %1501 = vmatprep.subr.mxu0 0.0
    %1502 = vmatpush1.msra.mxu0 0.0
    %1503 = vmatprep.subr.mxu0 0.0
    %1504 = vmatpush1.msra.mxu0 0.0
    %1505 = vmatprep.subr.mxu0 0.0
    %1506 = vmatpush1.msra.mxu0 0.0
    %1507 = vmatprep.subr.mxu0 0.0
    %1508 = vmatpush1.msra.mxu0 0.0
    %1509 = vmatprep.subr.mxu0 0.0
    %1510 = vmatpush1.msra.mxu0 0.0
    %1511 = vmatprep.subr.mxu0 0.0
    %1512 = vmatpush1.msra.mxu0 0.0
    %1513 = vmatprep.subr.mxu0 0.0
    %1514 = vmatpush1.msra.mxu0 0.0
    %1515 = vmatprep.subr.mxu0 0.0
    %1516 = vmatpush1.msra.mxu0 0.0
    %1517 = vmatprep.subr.mxu0 0.0
    %1518 = vmatpush1.msra.mxu0 0.0
    %1519 = vmatprep.subr.mxu0 0.0
    %1520 = vmatpush1.msra.mxu0 0.0
    %1521 = vmatprep.subr.mxu0 0.0
    %1522 = vmatpush1.msra.mxu0 0.0
    %1523 = vmatprep.subr.mxu0 0.0
    %1524 = vmatpush1.msra.mxu0 0.0
    %1525 = vmatprep.subr.mxu0 0.0
    %1526 = vmatpush1.msra.mxu0 0.0
    %1527 = vmatprep.subr.mxu0 0.0
    %1528 = vmatpush1.msra.mxu0 0.0
    %1529 = vmatprep.subr.mxu0 0.0
    %1530 = vmatpush1.msra.mxu0 0.0
    %1531 = vmatprep.subr.mxu0 0.0
    %1532 = vmatpush1.msra.mxu0 0.0
    %1533 = vmatprep.subr.mxu0 0.0
    %1534 = vmatpush1.msra.mxu0 0.0
    %1535 = vmatprep.subr.mxu0 0.0
    %1536 = vmatpush1.msra.mxu0 0.0
    %1537 = vmatprep.subr.mxu0 0.0
    %1538 = vmatpush1.msra.mxu0 0.0
    %1539 = vmatprep.subr.mxu0 0.0
    %1540 = vmatpush1.msra.mxu0 0.0
    %1541 = vmatprep.subr.mxu0 0.0
    %1542 = vmatpush1.msra.mxu0 0.0
    %1543 = vmatprep.mubr.f32.mxu0 0.0
    %v1544 = vand.u32 %v59, 4294901760
    %v1545 = vsub.f32 %v59, %v1544
    %v1546 = vand.u32 %v1545, 4294901760
    %v1547 = vsub.f32 %v1545, %v1546
    %v1548 = vand.u32 %v1547, 4294901760
    %1549 = vmatmul.mubr.f32.gmra.mrb[0].mxu0 %v1548
    %v1550 = vpop.f32.mrb[0].mxu0
    %v1551 = vadd.f32 0.0, %v1550
    %v1552 = vpop.f32.mrb[0].mxu0
    %1553 = vdwg.mxu0
    %1554 = vmatprep.subr.mxu0 0.0
    %v1555 = vand.u32 %v1471, 4294901760
    %v1556 = vsub.f32 %v1471, %v1555
    %v1557 = vand.u32 %v1556, 4294901760
    %v1558 = vsub.f32 %v1556, %v1557
    %v1559 = vand.u32 %v1558, 4294901760
    %1560 = vmatpush1.msra.mxu0 %v1559
    %1561 = vmatprep.subr.mxu0 0.0
    %1562 = vmatpush1.msra.mxu0 0.0
    %1563 = vmatprep.subr.mxu0 0.0
    %1564 = vmatpush1.msra.mxu0 0.0
    %1565 = vmatprep.subr.mxu0 0.0
    %1566 = vmatpush1.msra.mxu0 0.0
    %1567 = vmatprep.subr.mxu0 0.0
    %1568 = vmatpush1.msra.mxu0 0.0
    %1569 = vmatprep.subr.mxu0 0.0
    %1570 = vmatpush1.msra.mxu0 0.0
    %1571 = vmatprep.subr.mxu0 0.0
    %1572 = vmatpush1.msra.mxu0 0.0
    %1573 = vmatprep.subr.mxu0 0.0
    %1574 = vmatpush1.msra.mxu0 0.0
    %1575 = vmatprep.subr.mxu0 0.0
    %1576 = vmatpush1.msra.mxu0 0.0
    %1577 = vmatprep.subr.mxu0 0.0
    %1578 = vmatpush1.msra.mxu0 0.0
    %1579 = vmatprep.subr.mxu0 0.0
    %1580 = vmatpush1.msra.mxu0 0.0
    %1581 = vmatprep.subr.mxu0 0.0
    %1582 = vmatpush1.msra.mxu0 0.0
    %1583 = vmatprep.subr.mxu0 0.0
    %1584 = vmatpush1.msra.mxu0 0.0
    %1585 = vmatprep.subr.mxu0 0.0
    %1586 = vmatpush1.msra.mxu0 0.0
    %1587 = vmatprep.subr.mxu0 0.0
    %1588 = vmatpush1.msra.mxu0 0.0
    %1589 = vmatprep.subr.mxu0 0.0
    %1590 = vmatpush1.msra.mxu0 0.0
    %1591 = vmatprep.subr.mxu0 0.0
    %1592 = vmatpush1.msra.mxu0 0.0
    %1593 = vmatprep.subr.mxu0 0.0
    %1594 = vmatpush1.msra.mxu0 0.0
    %1595 = vmatprep.subr.mxu0 0.0
    %1596 = vmatpush1.msra.mxu0 0.0
    %1597 = vmatprep.subr.mxu0 0.0
    %1598 = vmatpush1.msra.mxu0 0.0
    %1599 = vmatprep.subr.mxu0 0.0
    %1600 = vmatpush1.msra.mxu0 0.0
    %1601 = vmatprep.subr.mxu0 0.0
    %1602 = vmatpush1.msra.mxu0 0.0
    %1603 = vmatprep.subr.mxu0 0.0
    %1604 = vmatpush1.msra.mxu0 0.0
    %1605 = vmatprep.subr.mxu0 0.0
    %1606 = vmatpush1.msra.mxu0 0.0
    %1607 = vmatprep.subr.mxu0 0.0
    %1608 = vmatpush1.msra.mxu0 0.0
    %1609 = vmatprep.subr.mxu0 0.0
    %1610 = vmatpush1.msra.mxu0 0.0
    %1611 = vmatprep.subr.mxu0 0.0
    %1612 = vmatpush1.msra.mxu0 0.0
    %1613 = vmatprep.subr.mxu0 0.0
    %1614 = vmatpush1.msra.mxu0 0.0
    %1615 = vmatprep.subr.mxu0 0.0
    %1616 = vmatpush1.msra.mxu0 0.0
    %1617 = vmatprep.subr.mxu0 0.0
    %1618 = vmatpush1.msra.mxu0 0.0
    %1619 = vmatprep.subr.mxu0 0.0
    %1620 = vmatpush1.msra.mxu0 0.0
    %1621 = vmatprep.subr.mxu0 0.0
    %1622 = vmatpush1.msra.mxu0 0.0
    %1623 = vmatprep.mubr.f32.mxu0 0.0
    %v1624 = vand.u32 %v59, 4294901760
    %1625 = vmatmul.mubr.f32.gmra.mrb[0].mxu0 %v1624
    %v1626 = vpop.f32.mrb[0].mxu0
    %v1627 = vadd.f32 %v1551, %v1626
    %v1628 = vpop.f32.mrb[0].mxu0
    %1629 = vdwg.mxu0
    %1630 = vmatprep.subr.mxu0 0.0
    %v1631 = vand.u32 %v1471, 4294901760
    %v1632 = vsub.f32 %v1471, %v1631
    %1633 = vmatpush1.msra.mxu0 %v1632
    %1634 = vmatprep.subr.mxu0 0.0
    %1635 = vmatpush1.msra.mxu0 0.0
    %1636 = vmatprep.subr.mxu0 0.0
    %1637 = vmatpush1.msra.mxu0 0.0
    %1638 = vmatprep.subr.mxu0 0.0
    %1639 = vmatpush1.msra.mxu0 0.0
    %1640 = vmatprep.subr.mxu0 0.0
    %1641 = vmatpush1.msra.mxu0 0.0
    %1642 = vmatprep.subr.mxu0 0.0
    %1643 = vmatpush1.msra.mxu0 0.0
    %1644 = vmatprep.subr.mxu0 0.0
    %1645 = vmatpush1.msra.mxu0 0.0
    %1646 = vmatprep.subr.mxu0 0.0
    %1647 = vmatpush1.msra.mxu0 0.0
    %1648 = vmatprep.subr.mxu0 0.0
    %1649 = vmatpush1.msra.mxu0 0.0
    %1650 = vmatprep.subr.mxu0 0.0
    %1651 = vmatpush1.msra.mxu0 0.0
    %1652 = vmatprep.subr.mxu0 0.0
    %1653 = vmatpush1.msra.mxu0 0.0
    %1654 = vmatprep.subr.mxu0 0.0
    %1655 = vmatpush1.msra.mxu0 0.0
    %1656 = vmatprep.subr.mxu0 0.0
    %1657 = vmatpush1.msra.mxu0 0.0
    %1658 = vmatprep.subr.mxu0 0.0
    %1659 = vmatpush1.msra.mxu0 0.0
    %1660 = vmatprep.subr.mxu0 0.0
    %1661 = vmatpush1.msra.mxu0 0.0
    %1662 = vmatprep.subr.mxu0 0.0
    %1663 = vmatpush1.msra.mxu0 0.0
    %1664 = vmatprep.subr.mxu0 0.0
    %1665 = vmatpush1.msra.mxu0 0.0
    %1666 = vmatprep.subr.mxu0 0.0
    %1667 = vmatpush1.msra.mxu0 0.0
    %1668 = vmatprep.subr.mxu0 0.0
    %1669 = vmatpush1.msra.mxu0 0.0
    %1670 = vmatprep.subr.mxu0 0.0
    %1671 = vmatpush1.msra.mxu0 0.0
    %1672 = vmatprep.subr.mxu0 0.0
    %1673 = vmatpush1.msra.mxu0 0.0
    %1674 = vmatprep.subr.mxu0 0.0
    %1675 = vmatpush1.msra.mxu0 0.0
    %1676 = vmatprep.subr.mxu0 0.0
    %1677 = vmatpush1.msra.mxu0 0.0
    %1678 = vmatprep.subr.mxu0 0.0
    %1679 = vmatpush1.msra.mxu0 0.0
    %1680 = vmatprep.subr.mxu0 0.0
    %1681 = vmatpush1.msra.mxu0 0.0
    %1682 = vmatprep.subr.mxu0 0.0
    %1683 = vmatpush1.msra.mxu0 0.0
    %1684 = vmatprep.subr.mxu0 0.0
    %1685 = vmatpush1.msra.mxu0 0.0
    %1686 = vmatprep.subr.mxu0 0.0
    %1687 = vmatpush1.msra.mxu0 0.0
    %1688 = vmatprep.subr.mxu0 0.0
    %1689 = vmatpush1.msra.mxu0 0.0
    %1690 = vmatprep.subr.mxu0 0.0
    %1691 = vmatpush1.msra.mxu0 0.0
    %1692 = vmatprep.subr.mxu0 0.0
    %1693 = vmatpush1.msra.mxu0 0.0
    %1694 = vmatprep.subr.mxu0 0.0
    %1695 = vmatpush1.msra.mxu0 0.0
    %1696 = vmatprep.mubr.f32.mxu0 0.0
    %v1697 = vand.u32 %v59, 4294901760
    %v1698 = vsub.f32 %v59, %v1697
    %1699 = vmatmul.mubr.f32.gmra.mrb[0].mxu0 %v1698
    %v1700 = vpop.f32.mrb[0].mxu0
    %v1701 = vadd.f32 %v1627, %v1700
    %v1702 = vpop.f32.mrb[0].mxu0
    %1703 = vdwg.mxu0
    %1704 = vmatprep.subr.mxu0 0.0
    %v1705 = vand.u32 %v1471, 4294901760
    %1706 = vmatpush1.msra.mxu0 %v1705
    %1707 = vmatprep.subr.mxu0 0.0
    %1708 = vmatpush1.msra.mxu0 0.0
    %1709 = vmatprep.subr.mxu0 0.0
    %1710 = vmatpush1.msra.mxu0 0.0
    %1711 = vmatprep.subr.mxu0 0.0
    %1712 = vmatpush1.msra.mxu0 0.0
    %1713 = vmatprep.subr.mxu0 0.0
    %1714 = vmatpush1.msra.mxu0 0.0
    %1715 = vmatprep.subr.mxu0 0.0
    %1716 = vmatpush1.msra.mxu0 0.0
    %1717 = vmatprep.subr.mxu0 0.0
    %1718 = vmatpush1.msra.mxu0 0.0
    %1719 = vmatprep.subr.mxu0 0.0
    %1720 = vmatpush1.msra.mxu0 0.0
    %1721 = vmatprep.subr.mxu0 0.0
    %1722 = vmatpush1.msra.mxu0 0.0
    %1723 = vmatprep.subr.mxu0 0.0
    %1724 = vmatpush1.msra.mxu0 0.0
    %1725 = vmatprep.subr.mxu0 0.0
    %1726 = vmatpush1.msra.mxu0 0.0
    %1727 = vmatprep.subr.mxu0 0.0
    %1728 = vmatpush1.msra.mxu0 0.0
    %1729 = vmatprep.subr.mxu0 0.0
    %1730 = vmatpush1.msra.mxu0 0.0
    %1731 = vmatprep.subr.mxu0 0.0
    %1732 = vmatpush1.msra.mxu0 0.0
    %1733 = vmatprep.subr.mxu0 0.0
    %1734 = vmatpush1.msra.mxu0 0.0
    %1735 = vmatprep.subr.mxu0 0.0
    %1736 = vmatpush1.msra.mxu0 0.0
    %1737 = vmatprep.subr.mxu0 0.0
    %1738 = vmatpush1.msra.mxu0 0.0
    %1739 = vmatprep.subr.mxu0 0.0
    %1740 = vmatpush1.msra.mxu0 0.0
    %1741 = vmatprep.subr.mxu0 0.0
    %1742 = vmatpush1.msra.mxu0 0.0
    %1743 = vmatprep.subr.mxu0 0.0
    %1744 = vmatpush1.msra.mxu0 0.0
    %1745 = vmatprep.subr.mxu0 0.0
    %1746 = vmatpush1.msra.mxu0 0.0
    %1747 = vmatprep.subr.mxu0 0.0
    %1748 = vmatpush1.msra.mxu0 0.0
    %1749 = vmatprep.subr.mxu0 0.0
    %1750 = vmatpush1.msra.mxu0 0.0
    %1751 = vmatprep.subr.mxu0 0.0
    %1752 = vmatpush1.msra.mxu0 0.0
    %1753 = vmatprep.subr.mxu0 0.0
    %1754 = vmatpush1.msra.mxu0 0.0
    %1755 = vmatprep.subr.mxu0 0.0
    %1756 = vmatpush1.msra.mxu0 0.0
    %1757 = vmatprep.subr.mxu0 0.0
    %1758 = vmatpush1.msra.mxu0 0.0
    %1759 = vmatprep.subr.mxu0 0.0
    %1760 = vmatpush1.msra.mxu0 0.0
    %1761 = vmatprep.subr.mxu0 0.0
    %1762 = vmatpush1.msra.mxu0 0.0
    %1763 = vmatprep.subr.mxu0 0.0
    %1764 = vmatpush1.msra.mxu0 0.0
    %1765 = vmatprep.subr.mxu0 0.0
    %1766 = vmatpush1.msra.mxu0 0.0
    %1767 = vmatprep.subr.mxu0 0.0
    %1768 = vmatpush1.msra.mxu0 0.0
    %1769 = vmatprep.mubr.f32.mxu0 0.0
    %v1770 = vand.u32 %v59, 4294901760
    %v1771 = vsub.f32 %v59, %v1770
    %v1772 = vand.u32 %v1771, 4294901760
    %1773 = vmatmul.mubr.f32.gmra.mrb[0].mxu0 %v1772
    %v1774 = vpop.f32.mrb[0].mxu0
    %v1775 = vadd.f32 %v1701, %v1774
    %v1776 = vpop.f32.mrb[0].mxu0
    %1777 = vdwg.mxu0
    %1778 = vmatprep.subr.mxu0 0.0
    %v1779 = vand.u32 %v1471, 4294901760
    %v1780 = vsub.f32 %v1471, %v1779
    %v1781 = vand.u32 %v1780, 4294901760
    %1782 = vmatpush1.msra.mxu0 %v1781
    %1783 = vmatprep.subr.mxu0 0.0
    %1784 = vmatpush1.msra.mxu0 0.0
    %1785 = vmatprep.subr.mxu0 0.0
    %1786 = vmatpush1.msra.mxu0 0.0
    %1787 = vmatprep.subr.mxu0 0.0
    %1788 = vmatpush1.msra.mxu0 0.0
    %1789 = vmatprep.subr.mxu0 0.0
    %1790 = vmatpush1.msra.mxu0 0.0
    %1791 = vmatprep.subr.mxu0 0.0
    %1792 = vmatpush1.msra.mxu0 0.0
    %1793 = vmatprep.subr.mxu0 0.0
    %1794 = vmatpush1.msra.mxu0 0.0
    %1795 = vmatprep.subr.mxu0 0.0
    %1796 = vmatpush1.msra.mxu0 0.0
    %1797 = vmatprep.subr.mxu0 0.0
    %1798 = vmatpush1.msra.mxu0 0.0
    %1799 = vmatprep.subr.mxu0 0.0
    %1800 = vmatpush1.msra.mxu0 0.0
    %1801 = vmatprep.subr.mxu0 0.0
    %1802 = vmatpush1.msra.mxu0 0.0
    %1803 = vmatprep.subr.mxu0 0.0
    %1804 = vmatpush1.msra.mxu0 0.0
    %1805 = vmatprep.subr.mxu0 0.0
    %1806 = vmatpush1.msra.mxu0 0.0
    %1807 = vmatprep.subr.mxu0 0.0
    %1808 = vmatpush1.msra.mxu0 0.0
    %1809 = vmatprep.subr.mxu0 0.0
    %1810 = vmatpush1.msra.mxu0 0.0
    %1811 = vmatprep.subr.mxu0 0.0
    %1812 = vmatpush1.msra.mxu0 0.0
    %1813 = vmatprep.subr.mxu0 0.0
    %1814 = vmatpush1.msra.mxu0 0.0
    %1815 = vmatprep.subr.mxu0 0.0
    %1816 = vmatpush1.msra.mxu0 0.0
    %1817 = vmatprep.subr.mxu0 0.0
    %1818 = vmatpush1.msra.mxu0 0.0
    %1819 = vmatprep.subr.mxu0 0.0
    %1820 = vmatpush1.msra.mxu0 0.0
    %1821 = vmatprep.subr.mxu0 0.0
    %1822 = vmatpush1.msra.mxu0 0.0
    %1823 = vmatprep.subr.mxu0 0.0
    %1824 = vmatpush1.msra.mxu0 0.0
    %1825 = vmatprep.subr.mxu0 0.0
    %1826 = vmatpush1.msra.mxu0 0.0
    %1827 = vmatprep.subr.mxu0 0.0
    %1828 = vmatpush1.msra.mxu0 0.0
    %1829 = vmatprep.subr.mxu0 0.0
    %1830 = vmatpush1.msra.mxu0 0.0
    %1831 = vmatprep.subr.mxu0 0.0
    %1832 = vmatpush1.msra.mxu0 0.0
    %1833 = vmatprep.subr.mxu0 0.0
    %1834 = vmatpush1.msra.mxu0 0.0
    %1835 = vmatprep.subr.mxu0 0.0
    %1836 = vmatpush1.msra.mxu0 0.0
    %1837 = vmatprep.subr.mxu0 0.0
    %1838 = vmatpush1.msra.mxu0 0.0
    %1839 = vmatprep.subr.mxu0 0.0
    %1840 = vmatpush1.msra.mxu0 0.0
    %1841 = vmatprep.subr.mxu0 0.0
    %1842 = vmatpush1.msra.mxu0 0.0
    %1843 = vmatprep.subr.mxu0 0.0
    %1844 = vmatpush1.msra.mxu0 0.0
    %1845 = vmatprep.mubr.f32.mxu0 0.0
    %v1846 = vand.u32 %v59, 4294901760
    %1847 = vmatmul.mubr.f32.gmra.mrb[0].mxu0 %v1846
    %v1848 = vpop.f32.mrb[0].mxu0
    %v1849 = vadd.f32 %v1775, %v1848
    %v1850 = vpop.f32.mrb[0].mxu0
    %1851 = vdwg.mxu0
    %1852 = vmatprep.subr.mxu0 0.0
    %v1853 = vand.u32 %v1471, 4294901760
    %1854 = vmatpush1.msra.mxu0 %v1853
    %1855 = vmatprep.subr.mxu0 0.0
    %1856 = vmatpush1.msra.mxu0 0.0
    %1857 = vmatprep.subr.mxu0 0.0
    %1858 = vmatpush1.msra.mxu0 0.0
    %1859 = vmatprep.subr.mxu0 0.0
    %1860 = vmatpush1.msra.mxu0 0.0
    %1861 = vmatprep.subr.mxu0 0.0
    %1862 = vmatpush1.msra.mxu0 0.0
    %1863 = vmatprep.subr.mxu0 0.0
    %1864 = vmatpush1.msra.mxu0 0.0
    %1865 = vmatprep.subr.mxu0 0.0
    %1866 = vmatpush1.msra.mxu0 0.0
    %1867 = vmatprep.subr.mxu0 0.0
    %1868 = vmatpush1.msra.mxu0 0.0
    %1869 = vmatprep.subr.mxu0 0.0
    %1870 = vmatpush1.msra.mxu0 0.0
    %1871 = vmatprep.subr.mxu0 0.0
    %1872 = vmatpush1.msra.mxu0 0.0
    %1873 = vmatprep.subr.mxu0 0.0
    %1874 = vmatpush1.msra.mxu0 0.0
    %1875 = vmatprep.subr.mxu0 0.0
    %1876 = vmatpush1.msra.mxu0 0.0
    %1877 = vmatprep.subr.mxu0 0.0
    %1878 = vmatpush1.msra.mxu0 0.0
    %1879 = vmatprep.subr.mxu0 0.0
    %1880 = vmatpush1.msra.mxu0 0.0
    %1881 = vmatprep.subr.mxu0 0.0
    %1882 = vmatpush1.msra.mxu0 0.0
    %1883 = vmatprep.subr.mxu0 0.0
    %1884 = vmatpush1.msra.mxu0 0.0
    %1885 = vmatprep.subr.mxu0 0.0
    %1886 = vmatpush1.msra.mxu0 0.0
    %1887 = vmatprep.subr.mxu0 0.0
    %1888 = vmatpush1.msra.mxu0 0.0
    %1889 = vmatprep.subr.mxu0 0.0
    %1890 = vmatpush1.msra.mxu0 0.0
    %1891 = vmatprep.subr.mxu0 0.0
    %1892 = vmatpush1.msra.mxu0 0.0
    %1893 = vmatprep.subr.mxu0 0.0
    %1894 = vmatpush1.msra.mxu0 0.0
    %1895 = vmatprep.subr.mxu0 0.0
    %1896 = vmatpush1.msra.mxu0 0.0
    %1897 = vmatprep.subr.mxu0 0.0
    %1898 = vmatpush1.msra.mxu0 0.0
    %1899 = vmatprep.subr.mxu0 0.0
    %1900 = vmatpush1.msra.mxu0 0.0
    %1901 = vmatprep.subr.mxu0 0.0
    %1902 = vmatpush1.msra.mxu0 0.0
    %1903 = vmatprep.subr.mxu0 0.0
    %1904 = vmatpush1.msra.mxu0 0.0
    %1905 = vmatprep.subr.mxu0 0.0
    %1906 = vmatpush1.msra.mxu0 0.0
    %1907 = vmatprep.subr.mxu0 0.0
    %1908 = vmatpush1.msra.mxu0 0.0
    %1909 = vmatprep.subr.mxu0 0.0
    %1910 = vmatpush1.msra.mxu0 0.0
    %1911 = vmatprep.subr.mxu0 0.0
    %1912 = vmatpush1.msra.mxu0 0.0
    %1913 = vmatprep.subr.mxu0 0.0
    %1914 = vmatpush1.msra.mxu0 0.0
    %1915 = vmatprep.subr.mxu0 0.0
    %1916 = vmatpush1.msra.mxu0 0.0
    %1917 = vmatprep.mubr.f32.mxu0 0.0
    %v1918 = vand.u32 %v59, 4294901760
    %1919 = vmatmul.mubr.f32.gmra.mrb[0].mxu0 %v1918
    %v1920 = vpop.f32.mrb[0].mxu0
    %v1921 = vadd.f32 %v1849, %v1920
    %v1922 = vpop.f32.mrb[0].mxu0
    %1923 = vdwg.mxu0
    %v1925 = vsel %vm57, %v1476, 0
    %v1928 = vsel %vm57, %v1477, 0
    %1930 = vmatprep.subr.mxu0 0.0
    %v1931 = vand.u32 %v1921, 4294901760
    %1932 = vmatpush1.msra.mxu0 %v1931
    %1933 = vmatprep.subr.mxu0 0.0
    %1934 = vmatpush1.msra.mxu0 0.0
    %1935 = vmatprep.subr.mxu0 0.0
    %1936 = vmatpush1.msra.mxu0 0.0
    %1937 = vmatprep.subr.mxu0 0.0
    %1938 = vmatpush1.msra.mxu0 0.0
    %1939 = vmatprep.subr.mxu0 0.0
    %1940 = vmatpush1.msra.mxu0 0.0
    %1941 = vmatprep.subr.mxu0 0.0
    %1942 = vmatpush1.msra.mxu0 0.0
    %1943 = vmatprep.subr.mxu0 0.0
    %1944 = vmatpush1.msra.mxu0 0.0
    %1945 = vmatprep.subr.mxu0 0.0
    %1946 = vmatpush1.msra.mxu0 0.0
    %1947 = vmatprep.subr.mxu0 0.0
    %1948 = vmatpush1.msra.mxu0 0.0
    %1949 = vmatprep.subr.mxu0 0.0
    %1950 = vmatpush1.msra.mxu0 0.0
    %1951 = vmatprep.subr.mxu0 0.0
    %1952 = vmatpush1.msra.mxu0 0.0
    %1953 = vmatprep.subr.mxu0 0.0
    %1954 = vmatpush1.msra.mxu0 0.0
    %1955 = vmatprep.subr.mxu0 0.0
    %1956 = vmatpush1.msra.mxu0 0.0
    %1957 = vmatprep.subr.mxu0 0.0
    %1958 = vmatpush1.msra.mxu0 0.0
    %1959 = vmatprep.subr.mxu0 0.0
    %1960 = vmatpush1.msra.mxu0 0.0
    %1961 = vmatprep.subr.mxu0 0.0
    %1962 = vmatpush1.msra.mxu0 0.0
    %1963 = vmatprep.subr.mxu0 0.0
    %1964 = vmatpush1.msra.mxu0 0.0
    %1965 = vmatprep.subr.mxu0 0.0
    %1966 = vmatpush1.msra.mxu0 0.0
    %1967 = vmatprep.subr.mxu0 0.0
    %1968 = vmatpush1.msra.mxu0 0.0
    %1969 = vmatprep.subr.mxu0 0.0
    %1970 = vmatpush1.msra.mxu0 0.0
    %1971 = vmatprep.subr.mxu0 0.0
    %1972 = vmatpush1.msra.mxu0 0.0
    %1973 = vmatprep.subr.mxu0 0.0
    %1974 = vmatpush1.msra.mxu0 0.0
    %1975 = vmatprep.subr.mxu0 0.0
    %1976 = vmatpush1.msra.mxu0 0.0
    %1977 = vmatprep.subr.mxu0 0.0
    %1978 = vmatpush1.msra.mxu0 0.0
    %1979 = vmatprep.subr.mxu0 0.0
    %1980 = vmatpush1.msra.mxu0 0.0
    %1981 = vmatprep.subr.mxu0 0.0
    %1982 = vmatpush1.msra.mxu0 0.0
    %1983 = vmatprep.subr.mxu0 0.0
    %1984 = vmatpush1.msra.mxu0 0.0
    %1985 = vmatprep.subr.mxu0 0.0
    %1986 = vmatpush1.msra.mxu0 0.0
    %1987 = vmatprep.subr.mxu0 0.0
    %1988 = vmatpush1.msra.mxu0 0.0
    %1989 = vmatprep.subr.mxu0 0.0
    %1990 = vmatpush1.msra.mxu0 0.0
    %1991 = vmatprep.subr.mxu0 0.0
    %1992 = vmatpush1.msra.mxu0 0.0
    %1993 = vmatprep.subr.mxu0 0.0
    %1994 = vmatpush1.msra.mxu0 0.0
    %1995 = vmatprep.mubr.f32.mxu0 0.0
    %v1996 = vand.u32 %v1925, 4294901760
    %v1997 = vsub.f32 %v1925, %v1996
    %v1998 = vand.u32 %v1997, 4294901760
    %v1999 = vsub.f32 %v1997, %v1998
    %v2000 = vand.u32 %v1999, 4294901760
    %2001 = vmatmul.mubr.f32.gmra.mrb[0].mxu0 %v2000
    %v2002 = vpop.f32.mrb[0].mxu0
    %v2003 = vadd.f32 0.0, %v2002
    %v2004 = vpop.f32.mrb[0].mxu0
    %2005 = vmatprep.mubr.f32.mxu0 0.0
    %v2006 = vand.u32 %v1928, 4294901760
    %v2007 = vsub.f32 %v1928, %v2006
    %v2008 = vand.u32 %v2007, 4294901760
    %v2009 = vsub.f32 %v2007, %v2008
    %v2010 = vand.u32 %v2009, 4294901760
    %2011 = vmatmul.mubr.f32.gmra.mrb[0].mxu0 %v2010
    %v2012 = vpop.f32.mrb[0].mxu0
    %v2013 = vadd.f32 0.0, %v2012
    %v2014 = vpop.f32.mrb[0].mxu0
    %2015 = vdwg.mxu0
    %2016 = vmatprep.subr.mxu0 0.0
    %v2017 = vand.u32 %v1921, 4294901760
    %v2018 = vsub.f32 %v1921, %v2017
    %v2019 = vand.u32 %v2018, 4294901760
    %v2020 = vsub.f32 %v2018, %v2019
    %v2021 = vand.u32 %v2020, 4294901760
    %2022 = vmatpush1.msra.mxu0 %v2021
    %2023 = vmatprep.subr.mxu0 0.0
    %2024 = vmatpush1.msra.mxu0 0.0
    %2025 = vmatprep.subr.mxu0 0.0
    %2026 = vmatpush1.msra.mxu0 0.0
    %2027 = vmatprep.subr.mxu0 0.0
    %2028 = vmatpush1.msra.mxu0 0.0
    %2029 = vmatprep.subr.mxu0 0.0
    %2030 = vmatpush1.msra.mxu0 0.0
    %2031 = vmatprep.subr.mxu0 0.0
    %2032 = vmatpush1.msra.mxu0 0.0
    %2033 = vmatprep.subr.mxu0 0.0
    %2034 = vmatpush1.msra.mxu0 0.0
    %2035 = vmatprep.subr.mxu0 0.0
    %2036 = vmatpush1.msra.mxu0 0.0
    %2037 = vmatprep.subr.mxu0 0.0
    %2038 = vmatpush1.msra.mxu0 0.0
    %2039 = vmatprep.subr.mxu0 0.0
    %2040 = vmatpush1.msra.mxu0 0.0
    %2041 = vmatprep.subr.mxu0 0.0
    %2042 = vmatpush1.msra.mxu0 0.0
    %2043 = vmatprep.subr.mxu0 0.0
    %2044 = vmatpush1.msra.mxu0 0.0
    %2045 = vmatprep.subr.mxu0 0.0
    %2046 = vmatpush1.msra.mxu0 0.0
    %2047 = vmatprep.subr.mxu0 0.0
    %2048 = vmatpush1.msra.mxu0 0.0
    %2049 = vmatprep.subr.mxu0 0.0
    %2050 = vmatpush1.msra.mxu0 0.0
    %2051 = vmatprep.subr.mxu0 0.0
    %2052 = vmatpush1.msra.mxu0 0.0
    %2053 = vmatprep.subr.mxu0 0.0
    %2054 = vmatpush1.msra.mxu0 0.0
    %2055 = vmatprep.subr.mxu0 0.0
    %2056 = vmatpush1.msra.mxu0 0.0
    %2057 = vmatprep.subr.mxu0 0.0
    %2058 = vmatpush1.msra.mxu0 0.0
    %2059 = vmatprep.subr.mxu0 0.0
    %2060 = vmatpush1.msra.mxu0 0.0
    %2061 = vmatprep.subr.mxu0 0.0
    %2062 = vmatpush1.msra.mxu0 0.0
    %2063 = vmatprep.subr.mxu0 0.0
    %2064 = vmatpush1.msra.mxu0 0.0
    %2065 = vmatprep.subr.mxu0 0.0
    %2066 = vmatpush1.msra.mxu0 0.0
    %2067 = vmatprep.subr.mxu0 0.0
    %2068 = vmatpush1.msra.mxu0 0.0
    %2069 = vmatprep.subr.mxu0 0.0
    %2070 = vmatpush1.msra.mxu0 0.0
    %2071 = vmatprep.subr.mxu0 0.0
    %2072 = vmatpush1.msra.mxu0 0.0
    %2073 = vmatprep.subr.mxu0 0.0
    %2074 = vmatpush1.msra.mxu0 0.0
    %2075 = vmatprep.subr.mxu0 0.0
    %2076 = vmatpush1.msra.mxu0 0.0
    %2077 = vmatprep.subr.mxu0 0.0
    %2078 = vmatpush1.msra.mxu0 0.0
    %2079 = vmatprep.subr.mxu0 0.0
    %2080 = vmatpush1.msra.mxu0 0.0
    %2081 = vmatprep.subr.mxu0 0.0
    %2082 = vmatpush1.msra.mxu0 0.0
    %2083 = vmatprep.subr.mxu0 0.0
    %2084 = vmatpush1.msra.mxu0 0.0
    %2085 = vmatprep.mubr.f32.mxu0 0.0
    %v2086 = vand.u32 %v1925, 4294901760
    %2087 = vmatmul.mubr.f32.gmra.mrb[0].mxu0 %v2086
    %v2088 = vpop.f32.mrb[0].mxu0
    %v2089 = vadd.f32 %v2003, %v2088
    %v2090 = vpop.f32.mrb[0].mxu0
    %2091 = vmatprep.mubr.f32.mxu0 0.0
    %v2092 = vand.u32 %v1928, 4294901760
    %2093 = vmatmul.mubr.f32.gmra.mrb[0].mxu0 %v2092
    %v2094 = vpop.f32.mrb[0].mxu0
    %v2095 = vadd.f32 %v2013, %v2094
    %v2096 = vpop.f32.mrb[0].mxu0
    %2097 = vdwg.mxu0
    %2098 = vmatprep.subr.mxu0 0.0
    %v2099 = vand.u32 %v1921, 4294901760
    %v2100 = vsub.f32 %v1921, %v2099
    %2101 = vmatpush1.msra.mxu0 %v2100
    %2102 = vmatprep.subr.mxu0 0.0
    %2103 = vmatpush1.msra.mxu0 0.0
    %2104 = vmatprep.subr.mxu0 0.0
    %2105 = vmatpush1.msra.mxu0 0.0
    %2106 = vmatprep.subr.mxu0 0.0
    %2107 = vmatpush1.msra.mxu0 0.0
    %2108 = vmatprep.subr.mxu0 0.0
    %2109 = vmatpush1.msra.mxu0 0.0
    %2110 = vmatprep.subr.mxu0 0.0
    %2111 = vmatpush1.msra.mxu0 0.0
    %2112 = vmatprep.subr.mxu0 0.0
    %2113 = vmatpush1.msra.mxu0 0.0
    %2114 = vmatprep.subr.mxu0 0.0
    %2115 = vmatpush1.msra.mxu0 0.0
    %2116 = vmatprep.subr.mxu0 0.0
    %2117 = vmatpush1.msra.mxu0 0.0
    %2118 = vmatprep.subr.mxu0 0.0
    %2119 = vmatpush1.msra.mxu0 0.0
    %2120 = vmatprep.subr.mxu0 0.0
    %2121 = vmatpush1.msra.mxu0 0.0
    %2122 = vmatprep.subr.mxu0 0.0
    %2123 = vmatpush1.msra.mxu0 0.0
    %2124 = vmatprep.subr.mxu0 0.0
    %2125 = vmatpush1.msra.mxu0 0.0
    %2126 = vmatprep.subr.mxu0 0.0
    %2127 = vmatpush1.msra.mxu0 0.0
    %2128 = vmatprep.subr.mxu0 0.0
    %2129 = vmatpush1.msra.mxu0 0.0
    %2130 = vmatprep.subr.mxu0 0.0
    %2131 = vmatpush1.msra.mxu0 0.0
    %2132 = vmatprep.subr.mxu0 0.0
    %2133 = vmatpush1.msra.mxu0 0.0
    %2134 = vmatprep.subr.mxu0 0.0
    %2135 = vmatpush1.msra.mxu0 0.0
    %2136 = vmatprep.subr.mxu0 0.0
    %2137 = vmatpush1.msra.mxu0 0.0
    %2138 = vmatprep.subr.mxu0 0.0
    %2139 = vmatpush1.msra.mxu0 0.0
    %2140 = vmatprep.subr.mxu0 0.0
    %2141 = vmatpush1.msra.mxu0 0.0
    %2142 = vmatprep.subr.mxu0 0.0
    %2143 = vmatpush1.msra.mxu0 0.0
    %2144 = vmatprep.subr.mxu0 0.0
    %2145 = vmatpush1.msra.mxu0 0.0
    %2146 = vmatprep.subr.mxu0 0.0
    %2147 = vmatpush1.msra.mxu0 0.0
    %2148 = vmatprep.subr.mxu0 0.0
    %2149 = vmatpush1.msra.mxu0 0.0
    %2150 = vmatprep.subr.mxu0 0.0
    %2151 = vmatpush1.msra.mxu0 0.0
    %2152 = vmatprep.subr.mxu0 0.0
    %2153 = vmatpush1.msra.mxu0 0.0
    %2154 = vmatprep.subr.mxu0 0.0
    %2155 = vmatpush1.msra.mxu0 0.0
    %2156 = vmatprep.subr.mxu0 0.0
    %2157 = vmatpush1.msra.mxu0 0.0
    %2158 = vmatprep.subr.mxu0 0.0
    %2159 = vmatpush1.msra.mxu0 0.0
    %2160 = vmatprep.subr.mxu0 0.0
    %2161 = vmatpush1.msra.mxu0 0.0
    %2162 = vmatprep.subr.mxu0 0.0
    %2163 = vmatpush1.msra.mxu0 0.0
    %2164 = vmatprep.mubr.f32.mxu0 0.0
    %v2165 = vand.u32 %v1925, 4294901760
    %v2166 = vsub.f32 %v1925, %v2165
    %2167 = vmatmul.mubr.f32.gmra.mrb[0].mxu0 %v2166
    %v2168 = vpop.f32.mrb[0].mxu0
    %v2169 = vadd.f32 %v2089, %v2168
    %v2170 = vpop.f32.mrb[0].mxu0
    %2171 = vmatprep.mubr.f32.mxu0 0.0
    %v2172 = vand.u32 %v1928, 4294901760
    %v2173 = vsub.f32 %v1928, %v2172
    %2174 = vmatmul.mubr.f32.gmra.mrb[0].mxu0 %v2173
    %v2175 = vpop.f32.mrb[0].mxu0
    %v2176 = vadd.f32 %v2095, %v2175
    %v2177 = vpop.f32.mrb[0].mxu0
    %2178 = vdwg.mxu0
    %2179 = vmatprep.subr.mxu0 0.0
    %v2180 = vand.u32 %v1921, 4294901760
    %2181 = vmatpush1.msra.mxu0 %v2180
    %2182 = vmatprep.subr.mxu0 0.0
    %2183 = vmatpush1.msra.mxu0 0.0
    %2184 = vmatprep.subr.mxu0 0.0
    %2185 = vmatpush1.msra.mxu0 0.0
    %2186 = vmatprep.subr.mxu0 0.0
    %2187 = vmatpush1.msra.mxu0 0.0
    %2188 = vmatprep.subr.mxu0 0.0
    %2189 = vmatpush1.msra.mxu0 0.0
    %2190 = vmatprep.subr.mxu0 0.0
    %2191 = vmatpush1.msra.mxu0 0.0
    %2192 = vmatprep.subr.mxu0 0.0
    %2193 = vmatpush1.msra.mxu0 0.0
    %2194 = vmatprep.subr.mxu0 0.0
    %2195 = vmatpush1.msra.mxu0 0.0
    %2196 = vmatprep.subr.mxu0 0.0
    %2197 = vmatpush1.msra.mxu0 0.0
    %2198 = vmatprep.subr.mxu0 0.0
    %2199 = vmatpush1.msra.mxu0 0.0
    %2200 = vmatprep.subr.mxu0 0.0
    %2201 = vmatpush1.msra.mxu0 0.0
    %2202 = vmatprep.subr.mxu0 0.0
    %2203 = vmatpush1.msra.mxu0 0.0
    %2204 = vmatprep.subr.mxu0 0.0
    %2205 = vmatpush1.msra.mxu0 0.0
    %2206 = vmatprep.subr.mxu0 0.0
    %2207 = vmatpush1.msra.mxu0 0.0
    %2208 = vmatprep.subr.mxu0 0.0
    %2209 = vmatpush1.msra.mxu0 0.0
    %2210 = vmatprep.subr.mxu0 0.0
    %2211 = vmatpush1.msra.mxu0 0.0
    %2212 = vmatprep.subr.mxu0 0.0
    %2213 = vmatpush1.msra.mxu0 0.0
    %2214 = vmatprep.subr.mxu0 0.0
    %2215 = vmatpush1.msra.mxu0 0.0
    %2216 = vmatprep.subr.mxu0 0.0
    %2217 = vmatpush1.msra.mxu0 0.0
    %2218 = vmatprep.subr.mxu0 0.0
    %2219 = vmatpush1.msra.mxu0 0.0
    %2220 = vmatprep.subr.mxu0 0.0
    %2221 = vmatpush1.msra.mxu0 0.0
    %2222 = vmatprep.subr.mxu0 0.0
    %2223 = vmatpush1.msra.mxu0 0.0
    %2224 = vmatprep.subr.mxu0 0.0
    %2225 = vmatpush1.msra.mxu0 0.0
    %2226 = vmatprep.subr.mxu0 0.0
    %2227 = vmatpush1.msra.mxu0 0.0
    %2228 = vmatprep.subr.mxu0 0.0
    %2229 = vmatpush1.msra.mxu0 0.0
    %2230 = vmatprep.subr.mxu0 0.0
    %2231 = vmatpush1.msra.mxu0 0.0
    %2232 = vmatprep.subr.mxu0 0.0
    %2233 = vmatpush1.msra.mxu0 0.0
    %2234 = vmatprep.subr.mxu0 0.0
    %2235 = vmatpush1.msra.mxu0 0.0
    %2236 = vmatprep.subr.mxu0 0.0
    %2237 = vmatpush1.msra.mxu0 0.0
    %2238 = vmatprep.subr.mxu0 0.0
    %2239 = vmatpush1.msra.mxu0 0.0
    %2240 = vmatprep.subr.mxu0 0.0
    %2241 = vmatpush1.msra.mxu0 0.0
    %2242 = vmatprep.subr.mxu0 0.0
    %2243 = vmatpush1.msra.mxu0 0.0
    %2244 = vmatprep.mubr.f32.mxu0 0.0
    %v2245 = vand.u32 %v1925, 4294901760
    %v2246 = vsub.f32 %v1925, %v2245
    %v2247 = vand.u32 %v2246, 4294901760
    %2248 = vmatmul.mubr.f32.gmra.mrb[0].mxu0 %v2247
    %v2249 = vpop.f32.mrb[0].mxu0
    %v2250 = vadd.f32 %v2169, %v2249
    %v2251 = vpop.f32.mrb[0].mxu0
    %2252 = vmatprep.mubr.f32.mxu0 0.0
    %v2253 = vand.u32 %v1928, 4294901760
    %v2254 = vsub.f32 %v1928, %v2253
    %v2255 = vand.u32 %v2254, 4294901760
    %2256 = vmatmul.mubr.f32.gmra.mrb[0].mxu0 %v2255
    %v2257 = vpop.f32.mrb[0].mxu0
    %v2258 = vadd.f32 %v2176, %v2257
    %v2259 = vpop.f32.mrb[0].mxu0
    %2260 = vdwg.mxu0
    %2261 = vmatprep.subr.mxu0 0.0
    %v2262 = vand.u32 %v1921, 4294901760
    %v2263 = vsub.f32 %v1921, %v2262
    %v2264 = vand.u32 %v2263, 4294901760
    %2265 = vmatpush1.msra.mxu0 %v2264
    %2266 = vmatprep.subr.mxu0 0.0
    %2267 = vmatpush1.msra.mxu0 0.0
    %2268 = vmatprep.subr.mxu0 0.0
    %2269 = vmatpush1.msra.mxu0 0.0
    %2270 = vmatprep.subr.mxu0 0.0
    %2271 = vmatpush1.msra.mxu0 0.0
    %2272 = vmatprep.subr.mxu0 0.0
    %2273 = vmatpush1.msra.mxu0 0.0
    %2274 = vmatprep.subr.mxu0 0.0
    %2275 = vmatpush1.msra.mxu0 0.0
    %2276 = vmatprep.subr.mxu0 0.0
    %2277 = vmatpush1.msra.mxu0 0.0
    %2278 = vmatprep.subr.mxu0 0.0
    %2279 = vmatpush1.msra.mxu0 0.0
    %2280 = vmatprep.subr.mxu0 0.0
    %2281 = vmatpush1.msra.mxu0 0.0
    %2282 = vmatprep.subr.mxu0 0.0
    %2283 = vmatpush1.msra.mxu0 0.0
    %2284 = vmatprep.subr.mxu0 0.0
    %2285 = vmatpush1.msra.mxu0 0.0
    %2286 = vmatprep.subr.mxu0 0.0
    %2287 = vmatpush1.msra.mxu0 0.0
    %2288 = vmatprep.subr.mxu0 0.0
    %2289 = vmatpush1.msra.mxu0 0.0
    %2290 = vmatprep.subr.mxu0 0.0
    %2291 = vmatpush1.msra.mxu0 0.0
    %2292 = vmatprep.subr.mxu0 0.0
    %2293 = vmatpush1.msra.mxu0 0.0
    %2294 = vmatprep.subr.mxu0 0.0
    %2295 = vmatpush1.msra.mxu0 0.0
    %2296 = vmatprep.subr.mxu0 0.0
    %2297 = vmatpush1.msra.mxu0 0.0
    %2298 = vmatprep.subr.mxu0 0.0
    %2299 = vmatpush1.msra.mxu0 0.0
    %2300 = vmatprep.subr.mxu0 0.0
    %2301 = vmatpush1.msra.mxu0 0.0
    %2302 = vmatprep.subr.mxu0 0.0
    %2303 = vmatpush1.msra.mxu0 0.0
    %2304 = vmatprep.subr.mxu0 0.0
    %2305 = vmatpush1.msra.mxu0 0.0
    %2306 = vmatprep.subr.mxu0 0.0
    %2307 = vmatpush1.msra.mxu0 0.0
    %2308 = vmatprep.subr.mxu0 0.0
    %2309 = vmatpush1.msra.mxu0 0.0
    %2310 = vmatprep.subr.mxu0 0.0
    %2311 = vmatpush1.msra.mxu0 0.0
    %2312 = vmatprep.subr.mxu0 0.0
    %2313 = vmatpush1.msra.mxu0 0.0
    %2314 = vmatprep.subr.mxu0 0.0
    %2315 = vmatpush1.msra.mxu0 0.0
    %2316 = vmatprep.subr.mxu0 0.0
    %2317 = vmatpush1.msra.mxu0 0.0
    %2318 = vmatprep.subr.mxu0 0.0
    %2319 = vmatpush1.msra.mxu0 0.0
    %2320 = vmatprep.subr.mxu0 0.0
    %2321 = vmatpush1.msra.mxu0 0.0
    %2322 = vmatprep.subr.mxu0 0.0
    %2323 = vmatpush1.msra.mxu0 0.0
    %2324 = vmatprep.subr.mxu0 0.0
    %2325 = vmatpush1.msra.mxu0 0.0
    %2326 = vmatprep.subr.mxu0 0.0
    %2327 = vmatpush1.msra.mxu0 0.0
    %2328 = vmatprep.mubr.f32.mxu0 0.0
    %v2329 = vand.u32 %v1925, 4294901760
    %2330 = vmatmul.mubr.f32.gmra.mrb[0].mxu0 %v2329
    %v2331 = vpop.f32.mrb[0].mxu0
    %v2332 = vadd.f32 %v2250, %v2331
    %v2333 = vpop.f32.mrb[0].mxu0
    %2334 = vmatprep.mubr.f32.mxu0 0.0
    %v2335 = vand.u32 %v1928, 4294901760
    %2336 = vmatmul.mubr.f32.gmra.mrb[0].mxu0 %v2335
    %v2337 = vpop.f32.mrb[0].mxu0
    %v2338 = vadd.f32 %v2258, %v2337
    %v2339 = vpop.f32.mrb[0].mxu0
    %2340 = vdwg.mxu0
    %2341 = vmatprep.subr.mxu0 0.0
    %v2342 = vand.u32 %v1921, 4294901760
    %2343 = vmatpush1.msra.mxu0 %v2342
    %2344 = vmatprep.subr.mxu0 0.0
    %2345 = vmatpush1.msra.mxu0 0.0
    %2346 = vmatprep.subr.mxu0 0.0
    %2347 = vmatpush1.msra.mxu0 0.0
    %2348 = vmatprep.subr.mxu0 0.0
    %2349 = vmatpush1.msra.mxu0 0.0
    %2350 = vmatprep.subr.mxu0 0.0
    %2351 = vmatpush1.msra.mxu0 0.0
    %2352 = vmatprep.subr.mxu0 0.0
    %2353 = vmatpush1.msra.mxu0 0.0
    %2354 = vmatprep.subr.mxu0 0.0
    %2355 = vmatpush1.msra.mxu0 0.0
    %2356 = vmatprep.subr.mxu0 0.0
    %2357 = vmatpush1.msra.mxu0 0.0
    %2358 = vmatprep.subr.mxu0 0.0
    %2359 = vmatpush1.msra.mxu0 0.0
    %2360 = vmatprep.subr.mxu0 0.0
    %2361 = vmatpush1.msra.mxu0 0.0
    %2362 = vmatprep.subr.mxu0 0.0
    %2363 = vmatpush1.msra.mxu0 0.0
    %2364 = vmatprep.subr.mxu0 0.0
    %2365 = vmatpush1.msra.mxu0 0.0
    %2366 = vmatprep.subr.mxu0 0.0
    %2367 = vmatpush1.msra.mxu0 0.0
    %2368 = vmatprep.subr.mxu0 0.0
    %2369 = vmatpush1.msra.mxu0 0.0
    %2370 = vmatprep.subr.mxu0 0.0
    %2371 = vmatpush1.msra.mxu0 0.0
    %2372 = vmatprep.subr.mxu0 0.0
    %2373 = vmatpush1.msra.mxu0 0.0
    %2374 = vmatprep.subr.mxu0 0.0
    %2375 = vmatpush1.msra.mxu0 0.0
    %2376 = vmatprep.subr.mxu0 0.0
    %2377 = vmatpush1.msra.mxu0 0.0
    %2378 = vmatprep.subr.mxu0 0.0
    %2379 = vmatpush1.msra.mxu0 0.0
    %2380 = vmatprep.subr.mxu0 0.0
    %2381 = vmatpush1.msra.mxu0 0.0
    %2382 = vmatprep.subr.mxu0 0.0
    %2383 = vmatpush1.msra.mxu0 0.0
    %2384 = vmatprep.subr.mxu0 0.0
    %2385 = vmatpush1.msra.mxu0 0.0
    %2386 = vmatprep.subr.mxu0 0.0
    %2387 = vmatpush1.msra.mxu0 0.0
    %2388 = vmatprep.subr.mxu0 0.0
    %2389 = vmatpush1.msra.mxu0 0.0
    %2390 = vmatprep.subr.mxu0 0.0
    %2391 = vmatpush1.msra.mxu0 0.0
    %2392 = vmatprep.subr.mxu0 0.0
    %2393 = vmatpush1.msra.mxu0 0.0
    %2394 = vmatprep.subr.mxu0 0.0
    %2395 = vmatpush1.msra.mxu0 0.0
    %2396 = vmatprep.subr.mxu0 0.0
    %2397 = vmatpush1.msra.mxu0 0.0
    %2398 = vmatprep.subr.mxu0 0.0
    %2399 = vmatpush1.msra.mxu0 0.0
    %2400 = vmatprep.subr.mxu0 0.0
    %2401 = vmatpush1.msra.mxu0 0.0
    %2402 = vmatprep.subr.mxu0 0.0
    %2403 = vmatpush1.msra.mxu0 0.0
    %2404 = vmatprep.subr.mxu0 0.0
    %2405 = vmatpush1.msra.mxu0 0.0
    %2406 = vmatprep.mubr.f32.mxu0 0.0
    %v2407 = vand.u32 %v1925, 4294901760
    %2408 = vmatmul.mubr.f32.gmra.mrb[0].mxu0 %v2407
    %v2409 = vpop.f32.mrb[0].mxu0
    %v2410 = vadd.f32 %v2332, %v2409
    %v2411 = vpop.f32.mrb[0].mxu0
    %2412 = vmatprep.mubr.f32.mxu0 0.0
    %v2413 = vand.u32 %v1928, 4294901760
    %2414 = vmatmul.mubr.f32.gmra.mrb[0].mxu0 %v2413
    %v2415 = vpop.f32.mrb[0].mxu0
    %v2416 = vadd.f32 %v2338, %v2415
    %v2417 = vpop.f32.mrb[0].mxu0
    %2418 = vdwg.mxu0
    %v2420 = vsel %vm57, %v55, 0
    %v2423 = vsel %vm57, %v56, 0
    %2425 = vmatprep.subr.mxu0 0.0
    %v2426 = vand.u32 %v504, 4294901760
    %2427 = vmatpush1.msra.mxu0 %v2426
    %2428 = vmatprep.subr.mxu0 0.0
    %2429 = vmatpush1.msra.mxu0 0.0
    %2430 = vmatprep.subr.mxu0 0.0
    %2431 = vmatpush1.msra.mxu0 0.0
    %2432 = vmatprep.subr.mxu0 0.0
    %2433 = vmatpush1.msra.mxu0 0.0
    %2434 = vmatprep.subr.mxu0 0.0
    %2435 = vmatpush1.msra.mxu0 0.0
    %2436 = vmatprep.subr.mxu0 0.0
    %2437 = vmatpush1.msra.mxu0 0.0
    %2438 = vmatprep.subr.mxu0 0.0
    %2439 = vmatpush1.msra.mxu0 0.0
    %2440 = vmatprep.subr.mxu0 0.0
    %2441 = vmatpush1.msra.mxu0 0.0
    %2442 = vmatprep.subr.mxu0 0.0
    %2443 = vmatpush1.msra.mxu0 0.0
    %2444 = vmatprep.subr.mxu0 0.0
    %2445 = vmatpush1.msra.mxu0 0.0
    %2446 = vmatprep.subr.mxu0 0.0
    %2447 = vmatpush1.msra.mxu0 0.0
    %2448 = vmatprep.subr.mxu0 0.0
    %2449 = vmatpush1.msra.mxu0 0.0
    %2450 = vmatprep.subr.mxu0 0.0
    %2451 = vmatpush1.msra.mxu0 0.0
    %2452 = vmatprep.subr.mxu0 0.0
    %2453 = vmatpush1.msra.mxu0 0.0
    %2454 = vmatprep.subr.mxu0 0.0
    %2455 = vmatpush1.msra.mxu0 0.0
    %2456 = vmatprep.subr.mxu0 0.0
    %2457 = vmatpush1.msra.mxu0 0.0
    %2458 = vmatprep.subr.mxu0 0.0
    %2459 = vmatpush1.msra.mxu0 0.0
    %2460 = vmatprep.subr.mxu0 0.0
    %2461 = vmatpush1.msra.mxu0 0.0
    %2462 = vmatprep.subr.mxu0 0.0
    %2463 = vmatpush1.msra.mxu0 0.0
    %2464 = vmatprep.subr.mxu0 0.0
    %2465 = vmatpush1.msra.mxu0 0.0
    %2466 = vmatprep.subr.mxu0 0.0
    %2467 = vmatpush1.msra.mxu0 0.0
    %2468 = vmatprep.subr.mxu0 0.0
    %2469 = vmatpush1.msra.mxu0 0.0
    %2470 = vmatprep.subr.mxu0 0.0
    %2471 = vmatpush1.msra.mxu0 0.0
    %2472 = vmatprep.subr.mxu0 0.0
    %2473 = vmatpush1.msra.mxu0 0.0
    %2474 = vmatprep.subr.mxu0 0.0
    %2475 = vmatpush1.msra.mxu0 0.0
    %2476 = vmatprep.subr.mxu0 0.0
    %2477 = vmatpush1.msra.mxu0 0.0
    %2478 = vmatprep.subr.mxu0 0.0
    %2479 = vmatpush1.msra.mxu0 0.0
    %2480 = vmatprep.subr.mxu0 0.0
    %2481 = vmatpush1.msra.mxu0 0.0
    %2482 = vmatprep.subr.mxu0 0.0
    %2483 = vmatpush1.msra.mxu0 0.0
    %2484 = vmatprep.subr.mxu0 0.0
    %2485 = vmatpush1.msra.mxu0 0.0
    %2486 = vmatprep.subr.mxu0 0.0
    %2487 = vmatpush1.msra.mxu0 0.0
    %2488 = vmatprep.subr.mxu0 0.0
    %2489 = vmatpush1.msra.mxu0 0.0
    %2490 = vmatprep.mubr.f32.mxu0 0.0
    %v2491 = vand.u32 %v2420, 4294901760
    %v2492 = vsub.f32 %v2420, %v2491
    %v2493 = vand.u32 %v2492, 4294901760
    %v2494 = vsub.f32 %v2492, %v2493
    %v2495 = vand.u32 %v2494, 4294901760
    %2496 = vmatmul.mubr.f32.gmra.mrb[0].mxu0 %v2495
    %v2497 = vpop.f32.mrb[0].mxu0
    %v2498 = vadd.f32 %v1454, %v2497
    %v2499 = vpop.f32.mrb[0].mxu0
    %2500 = vmatprep.mubr.f32.mxu0 0.0
    %v2501 = vand.u32 %v2423, 4294901760
    %v2502 = vsub.f32 %v2423, %v2501
    %v2503 = vand.u32 %v2502, 4294901760
    %v2504 = vsub.f32 %v2502, %v2503
    %v2505 = vand.u32 %v2504, 4294901760
    %2506 = vmatmul.mubr.f32.gmra.mrb[0].mxu0 %v2505
    %v2507 = vpop.f32.mrb[0].mxu0
    %v2508 = vadd.f32 %v1460, %v2507
    %v2509 = vpop.f32.mrb[0].mxu0
    %2510 = vdwg.mxu0
    %2511 = vmatprep.subr.mxu0 0.0
    %v2512 = vand.u32 %v504, 4294901760
    %v2513 = vsub.f32 %v504, %v2512
    %v2514 = vand.u32 %v2513, 4294901760
    %v2515 = vsub.f32 %v2513, %v2514
    %v2516 = vand.u32 %v2515, 4294901760
    %2517 = vmatpush1.msra.mxu0 %v2516
    %2518 = vmatprep.subr.mxu0 0.0
    %2519 = vmatpush1.msra.mxu0 0.0
    %2520 = vmatprep.subr.mxu0 0.0
    %2521 = vmatpush1.msra.mxu0 0.0
    %2522 = vmatprep.subr.mxu0 0.0
    %2523 = vmatpush1.msra.mxu0 0.0
    %2524 = vmatprep.subr.mxu0 0.0
    %2525 = vmatpush1.msra.mxu0 0.0
    %2526 = vmatprep.subr.mxu0 0.0
    %2527 = vmatpush1.msra.mxu0 0.0
    %2528 = vmatprep.subr.mxu0 0.0
    %2529 = vmatpush1.msra.mxu0 0.0
    %2530 = vmatprep.subr.mxu0 0.0
    %2531 = vmatpush1.msra.mxu0 0.0
    %2532 = vmatprep.subr.mxu0 0.0
    %2533 = vmatpush1.msra.mxu0 0.0
    %2534 = vmatprep.subr.mxu0 0.0
    %2535 = vmatpush1.msra.mxu0 0.0
    %2536 = vmatprep.subr.mxu0 0.0
    %2537 = vmatpush1.msra.mxu0 0.0
    %2538 = vmatprep.subr.mxu0 0.0
    %2539 = vmatpush1.msra.mxu0 0.0
    %2540 = vmatprep.subr.mxu0 0.0
    %2541 = vmatpush1.msra.mxu0 0.0
    %2542 = vmatprep.subr.mxu0 0.0
    %2543 = vmatpush1.msra.mxu0 0.0
    %2544 = vmatprep.subr.mxu0 0.0
    %2545 = vmatpush1.msra.mxu0 0.0
    %2546 = vmatprep.subr.mxu0 0.0
    %2547 = vmatpush1.msra.mxu0 0.0
    %2548 = vmatprep.subr.mxu0 0.0
    %2549 = vmatpush1.msra.mxu0 0.0
    %2550 = vmatprep.subr.mxu0 0.0
    %2551 = vmatpush1.msra.mxu0 0.0
    %2552 = vmatprep.subr.mxu0 0.0
    %2553 = vmatpush1.msra.mxu0 0.0
    %2554 = vmatprep.subr.mxu0 0.0
    %2555 = vmatpush1.msra.mxu0 0.0
    %2556 = vmatprep.subr.mxu0 0.0
    %2557 = vmatpush1.msra.mxu0 0.0
    %2558 = vmatprep.subr.mxu0 0.0
    %2559 = vmatpush1.msra.mxu0 0.0
    %2560 = vmatprep.subr.mxu0 0.0
    %2561 = vmatpush1.msra.mxu0 0.0
    %2562 = vmatprep.subr.mxu0 0.0
    %2563 = vmatpush1.msra.mxu0 0.0
    %2564 = vmatprep.subr.mxu0 0.0
    %2565 = vmatpush1.msra.mxu0 0.0
    %2566 = vmatprep.subr.mxu0 0.0
    %2567 = vmatpush1.msra.mxu0 0.0
    %2568 = vmatprep.subr.mxu0 0.0
    %2569 = vmatpush1.msra.mxu0 0.0
    %2570 = vmatprep.subr.mxu0 0.0
    %2571 = vmatpush1.msra.mxu0 0.0
    %2572 = vmatprep.subr.mxu0 0.0
    %2573 = vmatpush1.msra.mxu0 0.0
    %2574 = vmatprep.subr.mxu0 0.0
    %2575 = vmatpush1.msra.mxu0 0.0
    %2576 = vmatprep.subr.mxu0 0.0
    %2577 = vmatpush1.msra.mxu0 0.0
    %2578 = vmatprep.subr.mxu0 0.0
    %2579 = vmatpush1.msra.mxu0 0.0
    %2580 = vmatprep.mubr.f32.mxu0 0.0
    %v2581 = vand.u32 %v2420, 4294901760
    %2582 = vmatmul.mubr.f32.gmra.mrb[0].mxu0 %v2581
    %v2583 = vpop.f32.mrb[0].mxu0
    %v2584 = vadd.f32 %v2498, %v2583
    %v2585 = vpop.f32.mrb[0].mxu0
    %2586 = vmatprep.mubr.f32.mxu0 0.0
    %v2587 = vand.u32 %v2423, 4294901760
    %2588 = vmatmul.mubr.f32.gmra.mrb[0].mxu0 %v2587
    %v2589 = vpop.f32.mrb[0].mxu0
    %v2590 = vadd.f32 %v2508, %v2589
    %v2591 = vpop.f32.mrb[0].mxu0
    %2592 = vdwg.mxu0
    %2593 = vmatprep.subr.mxu0 0.0
    %v2594 = vand.u32 %v504, 4294901760
    %v2595 = vsub.f32 %v504, %v2594
    %2596 = vmatpush1.msra.mxu0 %v2595
    %2597 = vmatprep.subr.mxu0 0.0
    %2598 = vmatpush1.msra.mxu0 0.0
    %2599 = vmatprep.subr.mxu0 0.0
    %2600 = vmatpush1.msra.mxu0 0.0
    %2601 = vmatprep.subr.mxu0 0.0
    %2602 = vmatpush1.msra.mxu0 0.0
    %2603 = vmatprep.subr.mxu0 0.0
    %2604 = vmatpush1.msra.mxu0 0.0
    %2605 = vmatprep.subr.mxu0 0.0
    %2606 = vmatpush1.msra.mxu0 0.0
    %2607 = vmatprep.subr.mxu0 0.0
    %2608 = vmatpush1.msra.mxu0 0.0
    %2609 = vmatprep.subr.mxu0 0.0
    %2610 = vmatpush1.msra.mxu0 0.0
    %2611 = vmatprep.subr.mxu0 0.0
    %2612 = vmatpush1.msra.mxu0 0.0
    %2613 = vmatprep.subr.mxu0 0.0
    %2614 = vmatpush1.msra.mxu0 0.0
    %2615 = vmatprep.subr.mxu0 0.0
    %2616 = vmatpush1.msra.mxu0 0.0
    %2617 = vmatprep.subr.mxu0 0.0
    %2618 = vmatpush1.msra.mxu0 0.0
    %2619 = vmatprep.subr.mxu0 0.0
    %2620 = vmatpush1.msra.mxu0 0.0
    %2621 = vmatprep.subr.mxu0 0.0
    %2622 = vmatpush1.msra.mxu0 0.0
    %2623 = vmatprep.subr.mxu0 0.0
    %2624 = vmatpush1.msra.mxu0 0.0
    %2625 = vmatprep.subr.mxu0 0.0
    %2626 = vmatpush1.msra.mxu0 0.0
    %2627 = vmatprep.subr.mxu0 0.0
    %2628 = vmatpush1.msra.mxu0 0.0
    %2629 = vmatprep.subr.mxu0 0.0
    %2630 = vmatpush1.msra.mxu0 0.0
    %2631 = vmatprep.subr.mxu0 0.0
    %2632 = vmatpush1.msra.mxu0 0.0
    %2633 = vmatprep.subr.mxu0 0.0
    %2634 = vmatpush1.msra.mxu0 0.0
    %2635 = vmatprep.subr.mxu0 0.0
    %2636 = vmatpush1.msra.mxu0 0.0
    %2637 = vmatprep.subr.mxu0 0.0
    %2638 = vmatpush1.msra.mxu0 0.0
    %2639 = vmatprep.subr.mxu0 0.0
    %2640 = vmatpush1.msra.mxu0 0.0
    %2641 = vmatprep.subr.mxu0 0.0
    %2642 = vmatpush1.msra.mxu0 0.0
    %2643 = vmatprep.subr.mxu0 0.0
    %2644 = vmatpush1.msra.mxu0 0.0
    %2645 = vmatprep.subr.mxu0 0.0
    %2646 = vmatpush1.msra.mxu0 0.0
    %2647 = vmatprep.subr.mxu0 0.0
    %2648 = vmatpush1.msra.mxu0 0.0
    %2649 = vmatprep.subr.mxu0 0.0
    %2650 = vmatpush1.msra.mxu0 0.0
    %2651 = vmatprep.subr.mxu0 0.0
    %2652 = vmatpush1.msra.mxu0 0.0
    %2653 = vmatprep.subr.mxu0 0.0
    %2654 = vmatpush1.msra.mxu0 0.0
    %2655 = vmatprep.subr.mxu0 0.0
    %2656 = vmatpush1.msra.mxu0 0.0
    %2657 = vmatprep.subr.mxu0 0.0
    %2658 = vmatpush1.msra.mxu0 0.0
    %2659 = vmatprep.mubr.f32.mxu0 0.0
    %v2660 = vand.u32 %v2420, 4294901760
    %v2661 = vsub.f32 %v2420, %v2660
    %2662 = vmatmul.mubr.f32.gmra.mrb[0].mxu0 %v2661
    %v2663 = vpop.f32.mrb[0].mxu0
    %v2664 = vadd.f32 %v2584, %v2663
    %v2665 = vpop.f32.mrb[0].mxu0
    %2666 = vmatprep.mubr.f32.mxu0 0.0
    %v2667 = vand.u32 %v2423, 4294901760
    %v2668 = vsub.f32 %v2423, %v2667
    %2669 = vmatmul.mubr.f32.gmra.mrb[0].mxu0 %v2668
    %v2670 = vpop.f32.mrb[0].mxu0
    %v2671 = vadd.f32 %v2590, %v2670
    %v2672 = vpop.f32.mrb[0].mxu0
    %2673 = vdwg.mxu0
    %2674 = vmatprep.subr.mxu0 0.0
    %v2675 = vand.u32 %v504, 4294901760
    %2676 = vmatpush1.msra.mxu0 %v2675
    %2677 = vmatprep.subr.mxu0 0.0
    %2678 = vmatpush1.msra.mxu0 0.0
    %2679 = vmatprep.subr.mxu0 0.0
    %2680 = vmatpush1.msra.mxu0 0.0
    %2681 = vmatprep.subr.mxu0 0.0
    %2682 = vmatpush1.msra.mxu0 0.0
    %2683 = vmatprep.subr.mxu0 0.0
    %2684 = vmatpush1.msra.mxu0 0.0
    %2685 = vmatprep.subr.mxu0 0.0
    %2686 = vmatpush1.msra.mxu0 0.0
    %2687 = vmatprep.subr.mxu0 0.0
    %2688 = vmatpush1.msra.mxu0 0.0
    %2689 = vmatprep.subr.mxu0 0.0
    %2690 = vmatpush1.msra.mxu0 0.0
    %2691 = vmatprep.subr.mxu0 0.0
    %2692 = vmatpush1.msra.mxu0 0.0
    %2693 = vmatprep.subr.mxu0 0.0
    %2694 = vmatpush1.msra.mxu0 0.0
    %2695 = vmatprep.subr.mxu0 0.0
    %2696 = vmatpush1.msra.mxu0 0.0
    %2697 = vmatprep.subr.mxu0 0.0
    %2698 = vmatpush1.msra.mxu0 0.0
    %2699 = vmatprep.subr.mxu0 0.0
    %2700 = vmatpush1.msra.mxu0 0.0
    %2701 = vmatprep.subr.mxu0 0.0
    %2702 = vmatpush1.msra.mxu0 0.0
    %2703 = vmatprep.subr.mxu0 0.0
    %2704 = vmatpush1.msra.mxu0 0.0
    %2705 = vmatprep.subr.mxu0 0.0
    %2706 = vmatpush1.msra.mxu0 0.0
    %2707 = vmatprep.subr.mxu0 0.0
    %2708 = vmatpush1.msra.mxu0 0.0
    %2709 = vmatprep.subr.mxu0 0.0
    %2710 = vmatpush1.msra.mxu0 0.0
    %2711 = vmatprep.subr.mxu0 0.0
    %2712 = vmatpush1.msra.mxu0 0.0
    %2713 = vmatprep.subr.mxu0 0.0
    %2714 = vmatpush1.msra.mxu0 0.0
    %2715 = vmatprep.subr.mxu0 0.0
    %2716 = vmatpush1.msra.mxu0 0.0
    %2717 = vmatprep.subr.mxu0 0.0
    %2718 = vmatpush1.msra.mxu0 0.0
    %2719 = vmatprep.subr.mxu0 0.0
    %2720 = vmatpush1.msra.mxu0 0.0
    %2721 = vmatprep.subr.mxu0 0.0
    %2722 = vmatpush1.msra.mxu0 0.0
    %2723 = vmatprep.subr.mxu0 0.0
    %2724 = vmatpush1.msra.mxu0 0.0
    %2725 = vmatprep.subr.mxu0 0.0
    %2726 = vmatpush1.msra.mxu0 0.0
    %2727 = vmatprep.subr.mxu0 0.0
    %2728 = vmatpush1.msra.mxu0 0.0
    %2729 = vmatprep.subr.mxu0 0.0
    %2730 = vmatpush1.msra.mxu0 0.0
    %2731 = vmatprep.subr.mxu0 0.0
    %2732 = vmatpush1.msra.mxu0 0.0
    %2733 = vmatprep.subr.mxu0 0.0
    %2734 = vmatpush1.msra.mxu0 0.0
    %2735 = vmatprep.subr.mxu0 0.0
    %2736 = vmatpush1.msra.mxu0 0.0
    %2737 = vmatprep.subr.mxu0 0.0
    %2738 = vmatpush1.msra.mxu0 0.0
    %2739 = vmatprep.mubr.f32.mxu0 0.0
    %v2740 = vand.u32 %v2420, 4294901760
    %v2741 = vsub.f32 %v2420, %v2740
    %v2742 = vand.u32 %v2741, 4294901760
    %2743 = vmatmul.mubr.f32.gmra.mrb[0].mxu0 %v2742
    %v2744 = vpop.f32.mrb[0].mxu0
    %v2745 = vadd.f32 %v2664, %v2744
    %v2746 = vpop.f32.mrb[0].mxu0
    %2747 = vmatprep.mubr.f32.mxu0 0.0
    %v2748 = vand.u32 %v2423, 4294901760
    %v2749 = vsub.f32 %v2423, %v2748
    %v2750 = vand.u32 %v2749, 4294901760
    %2751 = vmatmul.mubr.f32.gmra.mrb[0].mxu0 %v2750
    %v2752 = vpop.f32.mrb[0].mxu0
    %v2753 = vadd.f32 %v2671, %v2752
    %v2754 = vpop.f32.mrb[0].mxu0
    %2755 = vdwg.mxu0
    %2756 = vmatprep.subr.mxu0 0.0
    %v2757 = vand.u32 %v504, 4294901760
    %v2758 = vsub.f32 %v504, %v2757
    %v2759 = vand.u32 %v2758, 4294901760
    %2760 = vmatpush1.msra.mxu0 %v2759
    %2761 = vmatprep.subr.mxu0 0.0
    %2762 = vmatpush1.msra.mxu0 0.0
    %2763 = vmatprep.subr.mxu0 0.0
    %2764 = vmatpush1.msra.mxu0 0.0
    %2765 = vmatprep.subr.mxu0 0.0
    %2766 = vmatpush1.msra.mxu0 0.0
    %2767 = vmatprep.subr.mxu0 0.0
    %2768 = vmatpush1.msra.mxu0 0.0
    %2769 = vmatprep.subr.mxu0 0.0
    %2770 = vmatpush1.msra.mxu0 0.0
    %2771 = vmatprep.subr.mxu0 0.0
    %2772 = vmatpush1.msra.mxu0 0.0
    %2773 = vmatprep.subr.mxu0 0.0
    %2774 = vmatpush1.msra.mxu0 0.0
    %2775 = vmatprep.subr.mxu0 0.0
    %2776 = vmatpush1.msra.mxu0 0.0
    %2777 = vmatprep.subr.mxu0 0.0
    %2778 = vmatpush1.msra.mxu0 0.0
    %2779 = vmatprep.subr.mxu0 0.0
    %2780 = vmatpush1.msra.mxu0 0.0
    %2781 = vmatprep.subr.mxu0 0.0
    %2782 = vmatpush1.msra.mxu0 0.0
    %2783 = vmatprep.subr.mxu0 0.0
    %2784 = vmatpush1.msra.mxu0 0.0
    %2785 = vmatprep.subr.mxu0 0.0
    %2786 = vmatpush1.msra.mxu0 0.0
    %2787 = vmatprep.subr.mxu0 0.0
    %2788 = vmatpush1.msra.mxu0 0.0
    %2789 = vmatprep.subr.mxu0 0.0
    %2790 = vmatpush1.msra.mxu0 0.0
    %2791 = vmatprep.subr.mxu0 0.0
    %2792 = vmatpush1.msra.mxu0 0.0
    %2793 = vmatprep.subr.mxu0 0.0
    %2794 = vmatpush1.msra.mxu0 0.0
    %2795 = vmatprep.subr.mxu0 0.0
    %2796 = vmatpush1.msra.mxu0 0.0
    %2797 = vmatprep.subr.mxu0 0.0
    %2798 = vmatpush1.msra.mxu0 0.0
    %2799 = vmatprep.subr.mxu0 0.0
    %2800 = vmatpush1.msra.mxu0 0.0
    %2801 = vmatprep.subr.mxu0 0.0
    %2802 = vmatpush1.msra.mxu0 0.0
    %2803 = vmatprep.subr.mxu0 0.0
    %2804 = vmatpush1.msra.mxu0 0.0
    %2805 = vmatprep.subr.mxu0 0.0
    %2806 = vmatpush1.msra.mxu0 0.0
    %2807 = vmatprep.subr.mxu0 0.0
    %2808 = vmatpush1.msra.mxu0 0.0
    %2809 = vmatprep.subr.mxu0 0.0
    %2810 = vmatpush1.msra.mxu0 0.0
    %2811 = vmatprep.subr.mxu0 0.0
    %2812 = vmatpush1.msra.mxu0 0.0
    %2813 = vmatprep.subr.mxu0 0.0
    %2814 = vmatpush1.msra.mxu0 0.0
    %2815 = vmatprep.subr.mxu0 0.0
    %2816 = vmatpush1.msra.mxu0 0.0
    %2817 = vmatprep.subr.mxu0 0.0
    %2818 = vmatpush1.msra.mxu0 0.0
    %2819 = vmatprep.subr.mxu0 0.0
    %2820 = vmatpush1.msra.mxu0 0.0
    %2821 = vmatprep.subr.mxu0 0.0
    %2822 = vmatpush1.msra.mxu0 0.0
    %2823 = vmatprep.mubr.f32.mxu0 0.0
    %v2824 = vand.u32 %v2420, 4294901760
    %2825 = vmatmul.mubr.f32.gmra.mrb[0].mxu0 %v2824
    %v2826 = vpop.f32.mrb[0].mxu0
    %v2827 = vadd.f32 %v2745, %v2826
    %v2828 = vpop.f32.mrb[0].mxu0
    %2829 = vmatprep.mubr.f32.mxu0 0.0
    %v2830 = vand.u32 %v2423, 4294901760
    %2831 = vmatmul.mubr.f32.gmra.mrb[0].mxu0 %v2830
    %v2832 = vpop.f32.mrb[0].mxu0
    %v2833 = vadd.f32 %v2753, %v2832
    %v2834 = vpop.f32.mrb[0].mxu0
    %2835 = vdwg.mxu0
    %2836 = vmatprep.subr.mxu0 0.0
    %v2837 = vand.u32 %v504, 4294901760
    %2838 = vmatpush1.msra.mxu0 %v2837
    %2839 = vmatprep.subr.mxu0 0.0
    %2840 = vmatpush1.msra.mxu0 0.0
    %2841 = vmatprep.subr.mxu0 0.0
    %2842 = vmatpush1.msra.mxu0 0.0
    %2843 = vmatprep.subr.mxu0 0.0
    %2844 = vmatpush1.msra.mxu0 0.0
    %2845 = vmatprep.subr.mxu0 0.0
    %2846 = vmatpush1.msra.mxu0 0.0
    %2847 = vmatprep.subr.mxu0 0.0
    %2848 = vmatpush1.msra.mxu0 0.0
    %2849 = vmatprep.subr.mxu0 0.0
    %2850 = vmatpush1.msra.mxu0 0.0
    %2851 = vmatprep.subr.mxu0 0.0
    %2852 = vmatpush1.msra.mxu0 0.0
    %2853 = vmatprep.subr.mxu0 0.0
    %2854 = vmatpush1.msra.mxu0 0.0
    %2855 = vmatprep.subr.mxu0 0.0
    %2856 = vmatpush1.msra.mxu0 0.0
    %2857 = vmatprep.subr.mxu0 0.0
    %2858 = vmatpush1.msra.mxu0 0.0
    %2859 = vmatprep.subr.mxu0 0.0
    %2860 = vmatpush1.msra.mxu0 0.0
    %2861 = vmatprep.subr.mxu0 0.0
    %2862 = vmatpush1.msra.mxu0 0.0
    %2863 = vmatprep.subr.mxu0 0.0
    %2864 = vmatpush1.msra.mxu0 0.0
    %2865 = vmatprep.subr.mxu0 0.0
    %2866 = vmatpush1.msra.mxu0 0.0
    %2867 = vmatprep.subr.mxu0 0.0
    %2868 = vmatpush1.msra.mxu0 0.0
    %2869 = vmatprep.subr.mxu0 0.0
    %2870 = vmatpush1.msra.mxu0 0.0
    %2871 = vmatprep.subr.mxu0 0.0
    %2872 = vmatpush1.msra.mxu0 0.0
    %2873 = vmatprep.subr.mxu0 0.0
    %2874 = vmatpush1.msra.mxu0 0.0
    %2875 = vmatprep.subr.mxu0 0.0
    %2876 = vmatpush1.msra.mxu0 0.0
    %2877 = vmatprep.subr.mxu0 0.0
    %2878 = vmatpush1.msra.mxu0 0.0
    %2879 = vmatprep.subr.mxu0 0.0
    %2880 = vmatpush1.msra.mxu0 0.0
    %2881 = vmatprep.subr.mxu0 0.0
    %2882 = vmatpush1.msra.mxu0 0.0
    %2883 = vmatprep.subr.mxu0 0.0
    %2884 = vmatpush1.msra.mxu0 0.0
    %2885 = vmatprep.subr.mxu0 0.0
    %2886 = vmatpush1.msra.mxu0 0.0
    %2887 = vmatprep.subr.mxu0 0.0
    %2888 = vmatpush1.msra.mxu0 0.0
    %2889 = vmatprep.subr.mxu0 0.0
    %2890 = vmatpush1.msra.mxu0 0.0
    %2891 = vmatprep.subr.mxu0 0.0
    %2892 = vmatpush1.msra.mxu0 0.0
    %2893 = vmatprep.subr.mxu0 0.0
    %2894 = vmatpush1.msra.mxu0 0.0
    %2895 = vmatprep.subr.mxu0 0.0
    %2896 = vmatpush1.msra.mxu0 0.0
    %2897 = vmatprep.subr.mxu0 0.0
    %2898 = vmatpush1.msra.mxu0 0.0
    %2899 = vmatprep.subr.mxu0 0.0
    %2900 = vmatpush1.msra.mxu0 0.0
    %2901 = vmatprep.mubr.f32.mxu0 0.0
    %v2902 = vand.u32 %v2420, 4294901760
    %2903 = vmatmul.mubr.f32.gmra.mrb[0].mxu0 %v2902
    %v2904 = vpop.f32.mrb[0].mxu0
    %v2905 = vadd.f32 %v2827, %v2904
    %v2906 = vpop.f32.mrb[0].mxu0
    %2907 = vmatprep.mubr.f32.mxu0 0.0
    %v2908 = vand.u32 %v2423, 4294901760
    %2909 = vmatmul.mubr.f32.gmra.mrb[0].mxu0 %v2908
    %v2910 = vpop.f32.mrb[0].mxu0
    %v2911 = vadd.f32 %v2833, %v2910
    %v2912 = vpop.f32.mrb[0].mxu0
    %2913 = vdwg.mxu0
    %v2914 = vadd.f32 %v2905, %v2410
    %v2915 = vadd.f32 %v2911, %v2416
    %s2916 = sld [smem:[#allocation2 + $0x9]]
    %s2917 = sadd.f32 %s2916, 0.1
    %v2918 = vstv %s2917
    %v2919 = vadd.f32 %v2914, %v2918
    %v2920 = vadd.f32 %v2915, %v2918
    %v2921 = vmax.f32 %v2919, 0.1
    %v2922 = vmax.f32 %v2920, 0.1
    %vm2923 = vcmask 130048
    %2924 = vst.msk [vmem:[#allocation5] sm:$0xff] %vm2923, %v2921
    %2925 = vst.msk [vmem:[#allocation5 + $0x8] sm:$0xff] %vm2923, %v2922
    // Predicated region
    $region14: #{model_forward.1} parent=1 // pred_check
      _
    $region15: #{model_forward.1} parent=1 // pred_check_branch
      %2927 = sbr.rel (0) target = $region17
    $region16: #{model_forward.1} parent=1 // pred_region
      %s2929 = ssub.s32 256, 256
      %2930 = vsyncadd [#allocation3], %s2929
      %s2931 = sshll.u32 [#allocation5], 4
      %s2932 = int_to_ptr.vmem [resolvable:$true] %s2931
      %2937 = dma.vmem_to_hbm [thread:$0]  %s2932, 256, %s2, [#allocation3], 128, 128, 8
    $region17: #{model_forward.1} parent=1 // pred_fallthru
      _
    // Predicated region
    $region18: #{model_forward.1} parent=1 // pred_check
      _
    $region19: #{model_forward.1} parent=1 // pred_check_branch
      %2939 = sbr.rel (0) target = $region21
    $region20: #{model_forward.1} parent=1 // pred_region
      %2940 = dma.done [#allocation3], 256
    $region21: #{model_forward.1} parent=1 // pred_fallthru
      _
    %2941 = vsyncpa [#allocation3], 1
    %2942 = vsyncpa [#allocation4], 1

</llo_original>
